<compile_context>
chip_gen: v6e
topology: v6e:2x2x1
jax: 0.10.0
libtpu: 0.0.40
codegen_flags: <defaults>
</compile_context>

<pallas_src>
import jax
import jax.numpy as jnp
from jax.experimental import pallas as pl
from jax.experimental.pallas import tpu as pltpu

VOCAB = 160
EMB = 8
SEQ = 12                 # 96 / 8 tokens per sample
CLASSES = 3
K = SEQ * VOCAB          # 1920 = 15 lane tiles of 128
C_PAD = 128              # lane-dense padded class dimension
MAX_B_TILE = 512         # ~7.5 KB/row one-hot -> ~3.8 MiB intermediate, safe on all gens


def _pose_classifier_kernel(idx_ref, w_ref, b_ref, out_ref):
    # idx_ref: (Bt, SEQ)   int32, token id already offset by slot: value in [s*V, (s+1)*V)
    # w_ref:   (K, C_PAD)  f32, pre-fused relu(table) @ W, zero-padded classes
    # b_ref:   (1, C_PAD)  f32, zero-padded bias
    # out_ref: (Bt, C_PAD) f32
    bt = idx_ref.shape[0]
    lane_iota = jax.lax.broadcasted_iota(jnp.int32, (bt, K), 1)      # (Bt, 1920)

    # Flattened one-hot over all SEQ slots. Each slot hits a disjoint 160-wide
    # column range, so summing the 12 compares is an exact scatter.
    onehot = jnp.zeros((bt, K), jnp.float32)
    for s in range(SEQ):                                             # 12 VPU compares
        onehot = onehot + (lane_iota == idx_ref[:, s:s + 1]).astype(jnp.float32)

    # Single MXU contraction: gather + ReLU + Linear all folded into one matmul.
    acc = jnp.dot(onehot, w_ref[...], preferred_element_type=jnp.float32)
    out_ref[...] = acc + b_ref[...]


def _round_up(x, m):
    return (x + m - 1) // m * m


@jax.jit
def pose_classifier_v3_forward(pose_idx, image, table, w_pt, bias_pt):
    """pose_idx: (B, SEQ) int; image unused (interface parity with the PyTorch forward).

    table:   (VOCAB, EMB) f32   -- nn.Embedding(160, 8).weight
    w_pt:    (CLASSES, SEQ*EMB) -- nn.Linear(96, 3).weight  (PyTorch layout)
    bias_pt: (CLASSES,)         -- nn.Linear(96, 3).bias
    """
    del image  # the PyTorch forward never uses inputs[1]
    B = pose_idx.shape[0]

    # --- Wrapper-side fusion: F[s*V + v, c] = relu(table[v]) . w_pt[c, s*E:(s+1)*E] ---
    relu_tab = jnp.maximum(table.astype(jnp.float32), 0.0)              # (V, E)
    w3 = w_pt.astype(jnp.float32).reshape(CLASSES, SEQ, EMB)            # (C, S, E)
    fused = jnp.einsum('ve,cse->svc', relu_tab, w3).reshape(K, CLASSES)  # (1920, 3)
    fused_pad = jnp.zeros((K, C_PAD), jnp.float32).at[:, :CLASSES].set(fused)
    bias_pad = jnp.zeros((1, C_PAD), jnp.float32).at[:, :CLASSES].set(
        bias_pt.astype(jnp.float32))

    # Offset token ids by slot so a single flattened one-hot addresses all slots.
    offs = (jnp.arange(SEQ, dtype=jnp.int32) * VOCAB)[None, :]           # (1, SEQ)
    idx_off = pose_idx.astype(jnp.int32) + offs                          # (B, SEQ)

    # --- Batch tiling ---
    b_tile = min(MAX_B_TILE, _round_up(B, 8))
    b_pad = _round_up(B, b_tile)
    if b_pad != B:
        idx_off = jnp.pad(idx_off, ((0, b_pad - B), (0, 0)))             # padded rows sliced away

    out = pl.pallas_call(
        _pose_classifier_kernel,
        out_shape=jax.ShapeDtypeStruct((b_pad, C_PAD), jnp.float32),
        grid=(b_pad // b_tile,),
        in_specs=[
            pl.BlockSpec((b_tile, SEQ), lambda i: (i, 0)),   # token ids: tiled over batch
            pl.BlockSpec((K, C_PAD), lambda i: (0, 0)),      # fused weight: VMEM resident
            pl.BlockSpec((1, C_PAD), lambda i: (0, 0)),      # bias: VMEM resident
        ],
        out_specs=pl.BlockSpec((b_tile, C_PAD), lambda i: (i, 0)),
        compiler_params=pltpu.CompilerParams(
            dimension_semantics=("parallel",)),               # v7x: shard batch over 2 TCs
    )(idx_off, fused_pad, bias_pad)

    return out[:B, :CLASSES]


def _reference(pose_idx, table, w_pt, bias_pt):
    emb = table[pose_idx]                               # (B, SEQ, EMB)
    flat = emb.reshape(pose_idx.shape[0], -1)           # (B, 96)
    flat = jnp.maximum(flat, 0.0)
    return flat @ w_pt.T + bias_pt[None, :]             # (B, 3)


if __name__ == "__main__":
    key = jax.random.PRNGKey(0)
    k_idx, k_img, k_tab, k_w, k_b = jax.random.split(key, 5)

    B = 2
    # inputs[0]: pose token indices, inputs[1]: image (unused by the forward)
    pose_idx = jax.random.randint(k_idx, (B, SEQ), 0, VOCAB, dtype=jnp.int32)
    image = jax.random.normal(k_img, (B, 3, 16, 16), dtype=jnp.float32)

    # Deterministic synthetic parameters (shapes from nn.Embedding(160,8), nn.Linear(96,3)).
    table = jax.random.normal(k_tab, (VOCAB, EMB), dtype=jnp.float32)
    w_pt = 0.1 * jax.random.normal(k_w, (CLASSES, SEQ * EMB), dtype=jnp.float32)  # (out, in)
    bias_pt = 0.1 * jax.random.normal(k_b, (CLASSES,), dtype=jnp.float32)

    out = pose_classifier_v3_forward(pose_idx, image, table, w_pt, bias_pt)
    out = jax.block_until_ready(out)

    ref = _reference(pose_idx, table, w_pt, bias_pt)
    assert out.shape == (B, CLASSES)
    assert jnp.allclose(out, ref, atol=1e-4, rtol=1e-4), (out, ref)
    print("KERNEL_OK")
</pallas_src>

<mosaic_0001>
module attributes {stable_mosaic.version = 11 : i64} {
  func.func @_pose_classifier_kernel(%arg0: i32, %arg1: memref<8x12xi32, #tpu.memory_space<vmem>>, %arg2: memref<1920x128xf32, #tpu.memory_space<vmem>>, %arg3: memref<1x128xf32, #tpu.memory_space<vmem>>, %arg4: memref<8x128xf32, #tpu.memory_space<vmem>>) attributes {dimension_semantics = [#tpu.dimension_semantics<parallel>], iteration_bounds = array<i64: 1>, scalar_prefetch = 0 : i64, scratch_operands = 0 : i64, tpu.core_type = #tpu.core_type<tc>, window_params = [{transform_indices = @transform_0, window_bounds = array<i64: 8, 12>}, {pipeline_mode = #tpu.pipeline_mode<synchronous>, transform_indices = @transform_1, window_bounds = array<i64: 1920, 128>}, {pipeline_mode = #tpu.pipeline_mode<synchronous>, transform_indices = @transform_2, window_bounds = array<i64: 1, 128>}, {transform_indices = @transform_3, window_bounds = array<i64: 8, 128>}]} {
    %0 = tpu.iota {dimensions = array<i32: 1>} : vector<8x1920xi32>
    %cst = arith.constant 0.000000e+00 : f32
    %1 = vector.broadcast %cst : f32 to vector<8x1920xf32>
    %c0 = arith.constant 0 : index
    %c0_0 = arith.constant 0 : index
    %2 = vector.load %arg1[%c0, %c0_0] : memref<8x12xi32, #tpu.memory_space<vmem>>, vector<8x1xi32>
    %3 = vector.broadcast %2 : vector<8x1xi32> to vector<8x1920xi32>
    %4 = arith.cmpi eq, %0, %3 : vector<8x1920xi32>
    %5 = arith.extui %4 : vector<8x1920xi1> to vector<8x1920xi32>
    %6 = arith.sitofp %5 : vector<8x1920xi32> to vector<8x1920xf32>
    %7 = arith.addf %1, %6 : vector<8x1920xf32>
    %c0_1 = arith.constant 0 : index
    %c1 = arith.constant 1 : index
    %8 = vector.load %arg1[%c0_1, %c1] : memref<8x12xi32, #tpu.memory_space<vmem>>, vector<8x1xi32>
    %9 = vector.broadcast %8 : vector<8x1xi32> to vector<8x1920xi32>
    %10 = arith.cmpi eq, %0, %9 : vector<8x1920xi32>
    %11 = arith.extui %10 : vector<8x1920xi1> to vector<8x1920xi32>
    %12 = arith.sitofp %11 : vector<8x1920xi32> to vector<8x1920xf32>
    %13 = arith.addf %7, %12 : vector<8x1920xf32>
    %c0_2 = arith.constant 0 : index
    %c2 = arith.constant 2 : index
    %14 = vector.load %arg1[%c0_2, %c2] : memref<8x12xi32, #tpu.memory_space<vmem>>, vector<8x1xi32>
    %15 = vector.broadcast %14 : vector<8x1xi32> to vector<8x1920xi32>
    %16 = arith.cmpi eq, %0, %15 : vector<8x1920xi32>
    %17 = arith.extui %16 : vector<8x1920xi1> to vector<8x1920xi32>
    %18 = arith.sitofp %17 : vector<8x1920xi32> to vector<8x1920xf32>
    %19 = arith.addf %13, %18 : vector<8x1920xf32>
    %c0_3 = arith.constant 0 : index
    %c3 = arith.constant 3 : index
    %20 = vector.load %arg1[%c0_3, %c3] : memref<8x12xi32, #tpu.memory_space<vmem>>, vector<8x1xi32>
    %21 = vector.broadcast %20 : vector<8x1xi32> to vector<8x1920xi32>
    %22 = arith.cmpi eq, %0, %21 : vector<8x1920xi32>
    %23 = arith.extui %22 : vector<8x1920xi1> to vector<8x1920xi32>
    %24 = arith.sitofp %23 : vector<8x1920xi32> to vector<8x1920xf32>
    %25 = arith.addf %19, %24 : vector<8x1920xf32>
    %c0_4 = arith.constant 0 : index
    %c4 = arith.constant 4 : index
    %26 = vector.load %arg1[%c0_4, %c4] : memref<8x12xi32, #tpu.memory_space<vmem>>, vector<8x1xi32>
    %27 = vector.broadcast %26 : vector<8x1xi32> to vector<8x1920xi32>
    %28 = arith.cmpi eq, %0, %27 : vector<8x1920xi32>
    %29 = arith.extui %28 : vector<8x1920xi1> to vector<8x1920xi32>
    %30 = arith.sitofp %29 : vector<8x1920xi32> to vector<8x1920xf32>
    %31 = arith.addf %25, %30 : vector<8x1920xf32>
    %c0_5 = arith.constant 0 : index
    %c5 = arith.constant 5 : index
    %32 = vector.load %arg1[%c0_5, %c5] : memref<8x12xi32, #tpu.memory_space<vmem>>, vector<8x1xi32>
    %33 = vector.broadcast %32 : vector<8x1xi32> to vector<8x1920xi32>
    %34 = arith.cmpi eq, %0, %33 : vector<8x1920xi32>
    %35 = arith.extui %34 : vector<8x1920xi1> to vector<8x1920xi32>
    %36 = arith.sitofp %35 : vector<8x1920xi32> to vector<8x1920xf32>
    %37 = arith.addf %31, %36 : vector<8x1920xf32>
    %c0_6 = arith.constant 0 : index
    %c6 = arith.constant 6 : index
    %38 = vector.load %arg1[%c0_6, %c6] : memref<8x12xi32, #tpu.memory_space<vmem>>, vector<8x1xi32>
    %39 = vector.broadcast %38 : vector<8x1xi32> to vector<8x1920xi32>
    %40 = arith.cmpi eq, %0, %39 : vector<8x1920xi32>
    %41 = arith.extui %40 : vector<8x1920xi1> to vector<8x1920xi32>
    %42 = arith.sitofp %41 : vector<8x1920xi32> to vector<8x1920xf32>
    %43 = arith.addf %37, %42 : vector<8x1920xf32>
    %c0_7 = arith.constant 0 : index
    %c7 = arith.constant 7 : index
    %44 = vector.load %arg1[%c0_7, %c7] : memref<8x12xi32, #tpu.memory_space<vmem>>, vector<8x1xi32>
    %45 = vector.broadcast %44 : vector<8x1xi32> to vector<8x1920xi32>
    %46 = arith.cmpi eq, %0, %45 : vector<8x1920xi32>
    %47 = arith.extui %46 : vector<8x1920xi1> to vector<8x1920xi32>
    %48 = arith.sitofp %47 : vector<8x1920xi32> to vector<8x1920xf32>
    %49 = arith.addf %43, %48 : vector<8x1920xf32>
    %c0_8 = arith.constant 0 : index
    %c8 = arith.constant 8 : index
    %50 = vector.load %arg1[%c0_8, %c8] : memref<8x12xi32, #tpu.memory_space<vmem>>, vector<8x1xi32>
    %51 = vector.broadcast %50 : vector<8x1xi32> to vector<8x1920xi32>
    %52 = arith.cmpi eq, %0, %51 : vector<8x1920xi32>
    %53 = arith.extui %52 : vector<8x1920xi1> to vector<8x1920xi32>
    %54 = arith.sitofp %53 : vector<8x1920xi32> to vector<8x1920xf32>
    %55 = arith.addf %49, %54 : vector<8x1920xf32>
    %c0_9 = arith.constant 0 : index
    %c9 = arith.constant 9 : index
    %56 = vector.load %arg1[%c0_9, %c9] : memref<8x12xi32, #tpu.memory_space<vmem>>, vector<8x1xi32>
    %57 = vector.broadcast %56 : vector<8x1xi32> to vector<8x1920xi32>
    %58 = arith.cmpi eq, %0, %57 : vector<8x1920xi32>
    %59 = arith.extui %58 : vector<8x1920xi1> to vector<8x1920xi32>
    %60 = arith.sitofp %59 : vector<8x1920xi32> to vector<8x1920xf32>
    %61 = arith.addf %55, %60 : vector<8x1920xf32>
    %c0_10 = arith.constant 0 : index
    %c10 = arith.constant 10 : index
    %62 = vector.load %arg1[%c0_10, %c10] : memref<8x12xi32, #tpu.memory_space<vmem>>, vector<8x1xi32>
    %63 = vector.broadcast %62 : vector<8x1xi32> to vector<8x1920xi32>
    %64 = arith.cmpi eq, %0, %63 : vector<8x1920xi32>
    %65 = arith.extui %64 : vector<8x1920xi1> to vector<8x1920xi32>
    %66 = arith.sitofp %65 : vector<8x1920xi32> to vector<8x1920xf32>
    %67 = arith.addf %61, %66 : vector<8x1920xf32>
    %c0_11 = arith.constant 0 : index
    %c11 = arith.constant 11 : index
    %68 = vector.load %arg1[%c0_11, %c11] : memref<8x12xi32, #tpu.memory_space<vmem>>, vector<8x1xi32>
    %69 = vector.broadcast %68 : vector<8x1xi32> to vector<8x1920xi32>
    %70 = arith.cmpi eq, %0, %69 : vector<8x1920xi32>
    %71 = arith.extui %70 : vector<8x1920xi1> to vector<8x1920xi32>
    %72 = arith.sitofp %71 : vector<8x1920xi32> to vector<8x1920xf32>
    %73 = arith.addf %67, %72 : vector<8x1920xf32>
    %c0_12 = arith.constant 0 : index
    %c0_13 = arith.constant 0 : index
    %74 = vector.load %arg2[%c0_12, %c0_13] : memref<1920x128xf32, #tpu.memory_space<vmem>>, vector<1920x128xf32>
    %cst_14 = arith.constant dense<0.000000e+00> : vector<8x128xf32>
    %75 = tpu.matmul %73, %74, %cst_14 {dimension_numbers = #tpu.dot_dimension_numbers<[1], [0], [0], [1], [0, 0, 1, 1], [], []>} : vector<8x1920xf32>, vector<1920x128xf32>, vector<8x128xf32> -> vector<8x128xf32>
    %c0_15 = arith.constant 0 : index
    %c0_16 = arith.constant 0 : index
    %76 = vector.load %arg3[%c0_15, %c0_16] : memref<1x128xf32, #tpu.memory_space<vmem>>, vector<1x128xf32>
    %77 = vector.broadcast %76 : vector<1x128xf32> to vector<8x128xf32>
    %78 = arith.addf %75, %77 : vector<8x128xf32>
    %c0_17 = arith.constant 0 : index
    %c0_18 = arith.constant 0 : index
    %79 = vector.load %arg4[%c0_17, %c0_18] : memref<8x128xf32, #tpu.memory_space<vmem>>, vector<8x128xf32>
    tpu.vector_store %arg4[%c0_17, %c0_18], %78 {strides = array<i32>} : memref<8x128xf32, #tpu.memory_space<vmem>>, vector<8x128xf32>,
    return
  }
  func.func @transform_0(%arg0: i32) -> (i32, i32) {
    %c0_i32 = arith.constant 0 : i32
    %c0_i32_0 = arith.constant 0 : i32
    return %arg0, %c0_i32 : i32, i32
  }
  func.func @transform_1(%arg0: i32) -> (i32, i32) {
    %c0_i32 = arith.constant 0 : i32
    %c0_i32_0 = arith.constant 0 : i32
    %c0_i32_1 = arith.constant 0 : i32
    return %c0_i32, %c0_i32_0 : i32, i32
  }
  func.func @transform_2(%arg0: i32) -> (i32, i32) {
    %c0_i32 = arith.constant 0 : i32
    %c0_i32_0 = arith.constant 0 : i32
    %c0_i32_1 = arith.constant 0 : i32
    return %c0_i32, %c0_i32_0 : i32, i32
  }
  func.func @transform_3(%arg0: i32) -> (i32, i32) {
    %c0_i32 = arith.constant 0 : i32
    %c0_i32_0 = arith.constant 0 : i32
    return %arg0, %c0_i32 : i32, i32
  }
}

</mosaic_0001>

<llo_original>
// kernel: pose_classifier_v3_forward.1
$region0: #{pose_classifier_v3_forward.1}
  #allocation0 [shape = 'u32[]', space=smem, size = 0x4, offset = 0x4, fixed_abs, tag = 'smem constant byte address 0x4 - core index']
  #allocation1 [shape = 'u32[144,128]{1,0:T(1,128)}', space=vmem, size = 0x12000, scoped, tag = 'internal scratch']
  %s0 = inlined_call_operand.vmem [shape: s32[8,12], index: 0, kind: input, shape index: {}]
  %s1 = inlined_call_operand.vmem [shape: f32[1920,128], index: 1, kind: input, shape index: {}]
  %s2 = inlined_call_operand.vmem [shape: f32[1,128], index: 2, kind: input, shape index: {}]
  %s3 = inlined_call_operand.vmem [shape: f32[8,128], index: 3, kind: output, shape index: {}]
  %s4 = sld [smem:[#allocation0]]
  $region22: #{pose_classifier_v3_forward.1} parent=0
    _
  %s6 = ssub.s32 1, %s4
  %s7 = scalar_select 0, %s6, %s4
  // Predicated region
  $region2: #{pose_classifier_v3_forward.1} parent=0 // pred_check
    _
  $region3: #{pose_classifier_v3_forward.1} parent=0 // pred_check_branch
    %9 = sbr.rel (0) target = $region5
  $region4: #{pose_classifier_v3_forward.1} parent=0 // pred_region
    _
  $region5: #{pose_classifier_v3_forward.1} parent=0 // pred_fallthru
    _
  // Predicated region
  $region6: #{pose_classifier_v3_forward.1} parent=0 // pred_check
    _
  $region7: #{pose_classifier_v3_forward.1} parent=0 // pred_check_branch
    %11 = sbr.rel (0) target = $region9
  $region8: #{pose_classifier_v3_forward.1} parent=0 // pred_region
    _
  $region9: #{pose_classifier_v3_forward.1} parent=0 // pred_fallthru
    _
  // Predicated region
  $region10: #{pose_classifier_v3_forward.1} parent=0 // pred_check
    _
  $region11: #{pose_classifier_v3_forward.1} parent=0 // pred_check_branch
    %13 = sbr.rel (0) target = $region13
  $region12: #{pose_classifier_v3_forward.1} parent=0 // pred_region
    _
  $region13: #{pose_classifier_v3_forward.1} parent=0 // pred_fallthru
    _
  %v14 = vlaneseq
  %v15 = vand.u32 %v14, 127
  %v16 = vadd.s32 %v15, 128
  %v17 = vadd.s32 %v15, 256
  %v18 = vadd.s32 %v15, 384
  %v19 = vadd.s32 %v15, 512
  %v20 = vadd.s32 %v15, 640
  %v21 = vadd.s32 %v15, 768
  %v22 = vadd.s32 %v15, 896
  %v23 = vadd.s32 %v15, 1024
  %v24 = vadd.s32 %v15, 1152
  %v25 = vadd.s32 %v15, 1280
  %v26 = vadd.s32 %v15, 1408
  %v27 = vadd.s32 %v15, 1536
  %v28 = vadd.s32 %v15, 1664
  %v29 = vadd.s32 %v15, 1792
  %v30 = vld [vmem:[%s0] sm:$0xff]
  %31 = vset.pattern.permute.xlu0 0
  %32 = vperm.xlu0 %31, %v30
  %v33 = vpop.permute.xlu0 %32
  %vm34 = vcmp.eq.s32.totalorder %v15, %v33
  %vm35 = vcmp.eq.s32.totalorder %v16, %v33
  %vm36 = vcmp.eq.s32.totalorder %v17, %v33
  %vm37 = vcmp.eq.s32.totalorder %v18, %v33
  %vm38 = vcmp.eq.s32.totalorder %v19, %v33
  %vm39 = vcmp.eq.s32.totalorder %v20, %v33
  %vm40 = vcmp.eq.s32.totalorder %v21, %v33
  %vm41 = vcmp.eq.s32.totalorder %v22, %v33
  %vm42 = vcmp.eq.s32.totalorder %v23, %v33
  %vm43 = vcmp.eq.s32.totalorder %v24, %v33
  %vm44 = vcmp.eq.s32.totalorder %v25, %v33
  %vm45 = vcmp.eq.s32.totalorder %v26, %v33
  %vm46 = vcmp.eq.s32.totalorder %v27, %v33
  %vm47 = vcmp.eq.s32.totalorder %v28, %v33
  %vm48 = vcmp.eq.s32.totalorder %v29, %v33
  %v49 = vsel %vm34, 1, 0
  %v50 = vsel %vm35, 1, 0
  %v51 = vsel %vm36, 1, 0
  %v52 = vsel %vm37, 1, 0
  %v53 = vsel %vm38, 1, 0
  %v54 = vsel %vm39, 1, 0
  %v55 = vsel %vm40, 1, 0
  %v56 = vsel %vm41, 1, 0
  %v57 = vsel %vm42, 1, 0
  %v58 = vsel %vm43, 1, 0
  %v59 = vsel %vm44, 1, 0
  %v60 = vsel %vm45, 1, 0
  %v61 = vsel %vm46, 1, 0
  %v62 = vsel %vm47, 1, 0
  %v63 = vsel %vm48, 1, 0
  %v64 = vcvt.s32.f32 %v49
  %v65 = vcvt.s32.f32 %v50
  %v66 = vcvt.s32.f32 %v51
  %v67 = vcvt.s32.f32 %v52
  %v68 = vcvt.s32.f32 %v53
  %v69 = vcvt.s32.f32 %v54
  %v70 = vcvt.s32.f32 %v55
  %v71 = vcvt.s32.f32 %v56
  %v72 = vcvt.s32.f32 %v57
  %v73 = vcvt.s32.f32 %v58
  %v74 = vcvt.s32.f32 %v59
  %v75 = vcvt.s32.f32 %v60
  %v76 = vcvt.s32.f32 %v61
  %v77 = vcvt.s32.f32 %v62
  %v78 = vcvt.s32.f32 %v63
  %v79 = vadd.f32 %v64, 0.0
  %v80 = vadd.f32 %v65, 0.0
  %v81 = vadd.f32 %v66, 0.0
  %v82 = vadd.f32 %v67, 0.0
  %v83 = vadd.f32 %v68, 0.0
  %v84 = vadd.f32 %v69, 0.0
  %v85 = vadd.f32 %v70, 0.0
  %v86 = vadd.f32 %v71, 0.0
  %v87 = vadd.f32 %v72, 0.0
  %v88 = vadd.f32 %v73, 0.0
  %v89 = vadd.f32 %v74, 0.0
  %v90 = vadd.f32 %v75, 0.0
  %v91 = vadd.f32 %v76, 0.0
  %v92 = vadd.f32 %v77, 0.0
  %v93 = vadd.f32 %v78, 0.0
  %94 = vset.pattern.permute.xlu0 1
  %95 = vperm.xlu0 %94, %v30
  %v96 = vpop.permute.xlu0 %95
  %vm97 = vcmp.eq.s32.totalorder %v15, %v96
  %vm98 = vcmp.eq.s32.totalorder %v16, %v96
  %vm99 = vcmp.eq.s32.totalorder %v17, %v96
  %vm100 = vcmp.eq.s32.totalorder %v18, %v96
  %vm101 = vcmp.eq.s32.totalorder %v19, %v96
  %vm102 = vcmp.eq.s32.totalorder %v20, %v96
  %vm103 = vcmp.eq.s32.totalorder %v21, %v96
  %vm104 = vcmp.eq.s32.totalorder %v22, %v96
  %vm105 = vcmp.eq.s32.totalorder %v23, %v96
  %vm106 = vcmp.eq.s32.totalorder %v24, %v96
  %vm107 = vcmp.eq.s32.totalorder %v25, %v96
  %vm108 = vcmp.eq.s32.totalorder %v26, %v96
  %vm109 = vcmp.eq.s32.totalorder %v27, %v96
  %vm110 = vcmp.eq.s32.totalorder %v28, %v96
  %vm111 = vcmp.eq.s32.totalorder %v29, %v96
  %v112 = vsel %vm97, 1, 0
  %v113 = vsel %vm98, 1, 0
  %v114 = vsel %vm99, 1, 0
  %v115 = vsel %vm100, 1, 0
  %v116 = vsel %vm101, 1, 0
  %v117 = vsel %vm102, 1, 0
  %v118 = vsel %vm103, 1, 0
  %v119 = vsel %vm104, 1, 0
  %v120 = vsel %vm105, 1, 0
  %v121 = vsel %vm106, 1, 0
  %v122 = vsel %vm107, 1, 0
  %v123 = vsel %vm108, 1, 0
  %v124 = vsel %vm109, 1, 0
  %v125 = vsel %vm110, 1, 0
  %v126 = vsel %vm111, 1, 0
  %v127 = vcvt.s32.f32 %v112
  %v128 = vcvt.s32.f32 %v113
  %v129 = vcvt.s32.f32 %v114
  %v130 = vcvt.s32.f32 %v115
  %v131 = vcvt.s32.f32 %v116
  %v132 = vcvt.s32.f32 %v117
  %v133 = vcvt.s32.f32 %v118
  %v134 = vcvt.s32.f32 %v119
  %v135 = vcvt.s32.f32 %v120
  %v136 = vcvt.s32.f32 %v121
  %v137 = vcvt.s32.f32 %v122
  %v138 = vcvt.s32.f32 %v123
  %v139 = vcvt.s32.f32 %v124
  %v140 = vcvt.s32.f32 %v125
  %v141 = vcvt.s32.f32 %v126
  %v142 = vadd.f32 %v79, %v127
  %v143 = vadd.f32 %v80, %v128
  %v144 = vadd.f32 %v81, %v129
  %v145 = vadd.f32 %v82, %v130
  %v146 = vadd.f32 %v83, %v131
  %v147 = vadd.f32 %v84, %v132
  %v148 = vadd.f32 %v85, %v133
  %v149 = vadd.f32 %v86, %v134
  %v150 = vadd.f32 %v87, %v135
  %v151 = vadd.f32 %v88, %v136
  %v152 = vadd.f32 %v89, %v137
  %v153 = vadd.f32 %v90, %v138
  %v154 = vadd.f32 %v91, %v139
  %v155 = vadd.f32 %v92, %v140
  %v156 = vadd.f32 %v93, %v141
  %157 = vset.pattern.permute.xlu0 2
  %158 = vperm.xlu0 %157, %v30
  %v159 = vpop.permute.xlu0 %158
  %vm160 = vcmp.eq.s32.totalorder %v15, %v159
  %vm161 = vcmp.eq.s32.totalorder %v16, %v159
  %vm162 = vcmp.eq.s32.totalorder %v17, %v159
  %vm163 = vcmp.eq.s32.totalorder %v18, %v159
  %vm164 = vcmp.eq.s32.totalorder %v19, %v159
  %vm165 = vcmp.eq.s32.totalorder %v20, %v159
  %vm166 = vcmp.eq.s32.totalorder %v21, %v159
  %vm167 = vcmp.eq.s32.totalorder %v22, %v159
  %vm168 = vcmp.eq.s32.totalorder %v23, %v159
  %vm169 = vcmp.eq.s32.totalorder %v24, %v159
  %vm170 = vcmp.eq.s32.totalorder %v25, %v159
  %vm171 = vcmp.eq.s32.totalorder %v26, %v159
  %vm172 = vcmp.eq.s32.totalorder %v27, %v159
  %vm173 = vcmp.eq.s32.totalorder %v28, %v159
  %vm174 = vcmp.eq.s32.totalorder %v29, %v159
  %v175 = vsel %vm160, 1, 0
  %v176 = vsel %vm161, 1, 0
  %v177 = vsel %vm162, 1, 0
  %v178 = vsel %vm163, 1, 0
  %v179 = vsel %vm164, 1, 0
  %v180 = vsel %vm165, 1, 0
  %v181 = vsel %vm166, 1, 0
  %v182 = vsel %vm167, 1, 0
  %v183 = vsel %vm168, 1, 0
  %v184 = vsel %vm169, 1, 0
  %v185 = vsel %vm170, 1, 0
  %v186 = vsel %vm171, 1, 0
  %v187 = vsel %vm172, 1, 0
  %v188 = vsel %vm173, 1, 0
  %v189 = vsel %vm174, 1, 0
  %v190 = vcvt.s32.f32 %v175
  %v191 = vcvt.s32.f32 %v176
  %v192 = vcvt.s32.f32 %v177
  %v193 = vcvt.s32.f32 %v178
  %v194 = vcvt.s32.f32 %v179
  %v195 = vcvt.s32.f32 %v180
  %v196 = vcvt.s32.f32 %v181
  %v197 = vcvt.s32.f32 %v182
  %v198 = vcvt.s32.f32 %v183
  %v199 = vcvt.s32.f32 %v184
  %v200 = vcvt.s32.f32 %v185
  %v201 = vcvt.s32.f32 %v186
  %v202 = vcvt.s32.f32 %v187
  %v203 = vcvt.s32.f32 %v188
  %v204 = vcvt.s32.f32 %v189
  %v205 = vadd.f32 %v142, %v190
  %v206 = vadd.f32 %v143, %v191
  %v207 = vadd.f32 %v144, %v192
  %v208 = vadd.f32 %v145, %v193
  %v209 = vadd.f32 %v146, %v194
  %v210 = vadd.f32 %v147, %v195
  %v211 = vadd.f32 %v148, %v196
  %v212 = vadd.f32 %v149, %v197
  %v213 = vadd.f32 %v150, %v198
  %v214 = vadd.f32 %v151, %v199
  %v215 = vadd.f32 %v152, %v200
  %v216 = vadd.f32 %v153, %v201
  %v217 = vadd.f32 %v154, %v202
  %v218 = vadd.f32 %v155, %v203
  %v219 = vadd.f32 %v156, %v204
  %220 = vset.pattern.permute.xlu0 3
  %221 = vperm.xlu0 %220, %v30
  %v222 = vpop.permute.xlu0 %221
  %vm223 = vcmp.eq.s32.totalorder %v15, %v222
  %vm224 = vcmp.eq.s32.totalorder %v16, %v222
  %vm225 = vcmp.eq.s32.totalorder %v17, %v222
  %vm226 = vcmp.eq.s32.totalorder %v18, %v222
  %vm227 = vcmp.eq.s32.totalorder %v19, %v222
  %vm228 = vcmp.eq.s32.totalorder %v20, %v222
  %vm229 = vcmp.eq.s32.totalorder %v21, %v222
  %vm230 = vcmp.eq.s32.totalorder %v22, %v222
  %vm231 = vcmp.eq.s32.totalorder %v23, %v222
  %vm232 = vcmp.eq.s32.totalorder %v24, %v222
  %vm233 = vcmp.eq.s32.totalorder %v25, %v222
  %vm234 = vcmp.eq.s32.totalorder %v26, %v222
  %vm235 = vcmp.eq.s32.totalorder %v27, %v222
  %vm236 = vcmp.eq.s32.totalorder %v28, %v222
  %vm237 = vcmp.eq.s32.totalorder %v29, %v222
  %v238 = vsel %vm223, 1, 0
  %v239 = vsel %vm224, 1, 0
  %v240 = vsel %vm225, 1, 0
  %v241 = vsel %vm226, 1, 0
  %v242 = vsel %vm227, 1, 0
  %v243 = vsel %vm228, 1, 0
  %v244 = vsel %vm229, 1, 0
  %v245 = vsel %vm230, 1, 0
  %v246 = vsel %vm231, 1, 0
  %v247 = vsel %vm232, 1, 0
  %v248 = vsel %vm233, 1, 0
  %v249 = vsel %vm234, 1, 0
  %v250 = vsel %vm235, 1, 0
  %v251 = vsel %vm236, 1, 0
  %v252 = vsel %vm237, 1, 0
  %v253 = vcvt.s32.f32 %v238
  %v254 = vcvt.s32.f32 %v239
  %v255 = vcvt.s32.f32 %v240
  %v256 = vcvt.s32.f32 %v241
  %v257 = vcvt.s32.f32 %v242
  %v258 = vcvt.s32.f32 %v243
  %v259 = vcvt.s32.f32 %v244
  %v260 = vcvt.s32.f32 %v245
  %v261 = vcvt.s32.f32 %v246
  %v262 = vcvt.s32.f32 %v247
  %v263 = vcvt.s32.f32 %v248
  %v264 = vcvt.s32.f32 %v249
  %v265 = vcvt.s32.f32 %v250
  %v266 = vcvt.s32.f32 %v251
  %v267 = vcvt.s32.f32 %v252
  %v268 = vadd.f32 %v205, %v253
  %v269 = vadd.f32 %v206, %v254
  %v270 = vadd.f32 %v207, %v255
  %v271 = vadd.f32 %v208, %v256
  %v272 = vadd.f32 %v209, %v257
  %v273 = vadd.f32 %v210, %v258
  %v274 = vadd.f32 %v211, %v259
  %v275 = vadd.f32 %v212, %v260
  %v276 = vadd.f32 %v213, %v261
  %v277 = vadd.f32 %v214, %v262
  %v278 = vadd.f32 %v215, %v263
  %v279 = vadd.f32 %v216, %v264
  %v280 = vadd.f32 %v217, %v265
  %v281 = vadd.f32 %v218, %v266
  %v282 = vadd.f32 %v219, %v267
  %283 = vset.pattern.permute.xlu0 4
  %284 = vperm.xlu0 %283, %v30
  %v285 = vpop.permute.xlu0 %284
  %vm286 = vcmp.eq.s32.totalorder %v15, %v285
  %vm287 = vcmp.eq.s32.totalorder %v16, %v285
  %vm288 = vcmp.eq.s32.totalorder %v17, %v285
  %vm289 = vcmp.eq.s32.totalorder %v18, %v285
  %vm290 = vcmp.eq.s32.totalorder %v19, %v285
  %vm291 = vcmp.eq.s32.totalorder %v20, %v285
  %vm292 = vcmp.eq.s32.totalorder %v21, %v285
  %vm293 = vcmp.eq.s32.totalorder %v22, %v285
  %vm294 = vcmp.eq.s32.totalorder %v23, %v285
  %vm295 = vcmp.eq.s32.totalorder %v24, %v285
  %vm296 = vcmp.eq.s32.totalorder %v25, %v285
  %vm297 = vcmp.eq.s32.totalorder %v26, %v285
  %vm298 = vcmp.eq.s32.totalorder %v27, %v285
  %vm299 = vcmp.eq.s32.totalorder %v28, %v285
  %vm300 = vcmp.eq.s32.totalorder %v29, %v285
  %v301 = vsel %vm286, 1, 0
  %v302 = vsel %vm287, 1, 0
  %v303 = vsel %vm288, 1, 0
  %v304 = vsel %vm289, 1, 0
  %v305 = vsel %vm290, 1, 0
  %v306 = vsel %vm291, 1, 0
  %v307 = vsel %vm292, 1, 0
  %v308 = vsel %vm293, 1, 0
  %v309 = vsel %vm294, 1, 0
  %v310 = vsel %vm295, 1, 0
  %v311 = vsel %vm296, 1, 0
  %v312 = vsel %vm297, 1, 0
  %v313 = vsel %vm298, 1, 0
  %v314 = vsel %vm299, 1, 0
  %v315 = vsel %vm300, 1, 0
  %v316 = vcvt.s32.f32 %v301
  %v317 = vcvt.s32.f32 %v302
  %v318 = vcvt.s32.f32 %v303
  %v319 = vcvt.s32.f32 %v304
  %v320 = vcvt.s32.f32 %v305
  %v321 = vcvt.s32.f32 %v306
  %v322 = vcvt.s32.f32 %v307
  %v323 = vcvt.s32.f32 %v308
  %v324 = vcvt.s32.f32 %v309
  %v325 = vcvt.s32.f32 %v310
  %v326 = vcvt.s32.f32 %v311
  %v327 = vcvt.s32.f32 %v312
  %v328 = vcvt.s32.f32 %v313
  %v329 = vcvt.s32.f32 %v314
  %v330 = vcvt.s32.f32 %v315
  %v331 = vadd.f32 %v268, %v316
  %v332 = vadd.f32 %v269, %v317
  %v333 = vadd.f32 %v270, %v318
  %v334 = vadd.f32 %v271, %v319
  %v335 = vadd.f32 %v272, %v320
  %v336 = vadd.f32 %v273, %v321
  %v337 = vadd.f32 %v274, %v322
  %v338 = vadd.f32 %v275, %v323
  %v339 = vadd.f32 %v276, %v324
  %v340 = vadd.f32 %v277, %v325
  %v341 = vadd.f32 %v278, %v326
  %v342 = vadd.f32 %v279, %v327
  %v343 = vadd.f32 %v280, %v328
  %v344 = vadd.f32 %v281, %v329
  %v345 = vadd.f32 %v282, %v330
  %346 = vset.pattern.permute.xlu0 5
  %347 = vperm.xlu0 %346, %v30
  %v348 = vpop.permute.xlu0 %347
  %vm349 = vcmp.eq.s32.totalorder %v15, %v348
  %vm350 = vcmp.eq.s32.totalorder %v16, %v348
  %vm351 = vcmp.eq.s32.totalorder %v17, %v348
  %vm352 = vcmp.eq.s32.totalorder %v18, %v348
  %vm353 = vcmp.eq.s32.totalorder %v19, %v348
  %vm354 = vcmp.eq.s32.totalorder %v20, %v348
  %vm355 = vcmp.eq.s32.totalorder %v21, %v348
  %vm356 = vcmp.eq.s32.totalorder %v22, %v348
  %vm357 = vcmp.eq.s32.totalorder %v23, %v348
  %vm358 = vcmp.eq.s32.totalorder %v24, %v348
  %vm359 = vcmp.eq.s32.totalorder %v25, %v348
  %vm360 = vcmp.eq.s32.totalorder %v26, %v348
  %vm361 = vcmp.eq.s32.totalorder %v27, %v348
  %vm362 = vcmp.eq.s32.totalorder %v28, %v348
  %vm363 = vcmp.eq.s32.totalorder %v29, %v348
  %v364 = vsel %vm349, 1, 0
  %v365 = vsel %vm350, 1, 0
  %v366 = vsel %vm351, 1, 0
  %v367 = vsel %vm352, 1, 0
  %v368 = vsel %vm353, 1, 0
  %v369 = vsel %vm354, 1, 0
  %v370 = vsel %vm355, 1, 0
  %v371 = vsel %vm356, 1, 0
  %v372 = vsel %vm357, 1, 0
  %v373 = vsel %vm358, 1, 0
  %v374 = vsel %vm359, 1, 0
  %v375 = vsel %vm360, 1, 0
  %v376 = vsel %vm361, 1, 0
  %v377 = vsel %vm362, 1, 0
  %v378 = vsel %vm363, 1, 0
  %v379 = vcvt.s32.f32 %v364
  %v380 = vcvt.s32.f32 %v365
  %v381 = vcvt.s32.f32 %v366
  %v382 = vcvt.s32.f32 %v367
  %v383 = vcvt.s32.f32 %v368
  %v384 = vcvt.s32.f32 %v369
  %v385 = vcvt.s32.f32 %v370
  %v386 = vcvt.s32.f32 %v371
  %v387 = vcvt.s32.f32 %v372
  %v388 = vcvt.s32.f32 %v373
  %v389 = vcvt.s32.f32 %v374
  %v390 = vcvt.s32.f32 %v375
  %v391 = vcvt.s32.f32 %v376
  %v392 = vcvt.s32.f32 %v377
  %v393 = vcvt.s32.f32 %v378
  %v394 = vadd.f32 %v331, %v379
  %v395 = vadd.f32 %v332, %v380
  %v396 = vadd.f32 %v333, %v381
  %v397 = vadd.f32 %v334, %v382
  %v398 = vadd.f32 %v335, %v383
  %v399 = vadd.f32 %v336, %v384
  %v400 = vadd.f32 %v337, %v385
  %v401 = vadd.f32 %v338, %v386
  %v402 = vadd.f32 %v339, %v387
  %v403 = vadd.f32 %v340, %v388
  %v404 = vadd.f32 %v341, %v389
  %v405 = vadd.f32 %v342, %v390
  %v406 = vadd.f32 %v343, %v391
  %v407 = vadd.f32 %v344, %v392
  %v408 = vadd.f32 %v345, %v393
  %409 = vset.pattern.permute.xlu0 6
  %410 = vperm.xlu0 %409, %v30
  %v411 = vpop.permute.xlu0 %410
  %vm412 = vcmp.eq.s32.totalorder %v15, %v411
  %vm413 = vcmp.eq.s32.totalorder %v16, %v411
  %vm414 = vcmp.eq.s32.totalorder %v17, %v411
  %vm415 = vcmp.eq.s32.totalorder %v18, %v411
  %vm416 = vcmp.eq.s32.totalorder %v19, %v411
  %vm417 = vcmp.eq.s32.totalorder %v20, %v411
  %vm418 = vcmp.eq.s32.totalorder %v21, %v411
  %vm419 = vcmp.eq.s32.totalorder %v22, %v411
  %vm420 = vcmp.eq.s32.totalorder %v23, %v411
  %vm421 = vcmp.eq.s32.totalorder %v24, %v411
  %vm422 = vcmp.eq.s32.totalorder %v25, %v411
  %vm423 = vcmp.eq.s32.totalorder %v26, %v411
  %vm424 = vcmp.eq.s32.totalorder %v27, %v411
  %vm425 = vcmp.eq.s32.totalorder %v28, %v411
  %vm426 = vcmp.eq.s32.totalorder %v29, %v411
  %v427 = vsel %vm412, 1, 0
  %v428 = vsel %vm413, 1, 0
  %v429 = vsel %vm414, 1, 0
  %v430 = vsel %vm415, 1, 0
  %v431 = vsel %vm416, 1, 0
  %v432 = vsel %vm417, 1, 0
  %v433 = vsel %vm418, 1, 0
  %v434 = vsel %vm419, 1, 0
  %v435 = vsel %vm420, 1, 0
  %v436 = vsel %vm421, 1, 0
  %v437 = vsel %vm422, 1, 0
  %v438 = vsel %vm423, 1, 0
  %v439 = vsel %vm424, 1, 0
  %v440 = vsel %vm425, 1, 0
  %v441 = vsel %vm426, 1, 0
  %v442 = vcvt.s32.f32 %v427
  %v443 = vcvt.s32.f32 %v428
  %v444 = vcvt.s32.f32 %v429
  %v445 = vcvt.s32.f32 %v430
  %v446 = vcvt.s32.f32 %v431
  %v447 = vcvt.s32.f32 %v432
  %v448 = vcvt.s32.f32 %v433
  %v449 = vcvt.s32.f32 %v434
  %v450 = vcvt.s32.f32 %v435
  %v451 = vcvt.s32.f32 %v436
  %v452 = vcvt.s32.f32 %v437
  %v453 = vcvt.s32.f32 %v438
  %v454 = vcvt.s32.f32 %v439
  %v455 = vcvt.s32.f32 %v440
  %v456 = vcvt.s32.f32 %v441
  %v457 = vadd.f32 %v394, %v442
  %v458 = vadd.f32 %v395, %v443
  %v459 = vadd.f32 %v396, %v444
  %v460 = vadd.f32 %v397, %v445
  %v461 = vadd.f32 %v398, %v446
  %v462 = vadd.f32 %v399, %v447
  %v463 = vadd.f32 %v400, %v448
  %v464 = vadd.f32 %v401, %v449
  %v465 = vadd.f32 %v402, %v450
  %v466 = vadd.f32 %v403, %v451
  %v467 = vadd.f32 %v404, %v452
  %v468 = vadd.f32 %v405, %v453
  %v469 = vadd.f32 %v406, %v454
  %v470 = vadd.f32 %v407, %v455
  %v471 = vadd.f32 %v408, %v456
  %472 = vset.pattern.permute.xlu0 7
  %473 = vperm.xlu0 %472, %v30
  %v474 = vpop.permute.xlu0 %473
  %vm475 = vcmp.eq.s32.totalorder %v15, %v474
  %vm476 = vcmp.eq.s32.totalorder %v16, %v474
  %vm477 = vcmp.eq.s32.totalorder %v17, %v474
  %vm478 = vcmp.eq.s32.totalorder %v18, %v474
  %vm479 = vcmp.eq.s32.totalorder %v19, %v474
  %vm480 = vcmp.eq.s32.totalorder %v20, %v474
  %vm481 = vcmp.eq.s32.totalorder %v21, %v474
  %vm482 = vcmp.eq.s32.totalorder %v22, %v474
  %vm483 = vcmp.eq.s32.totalorder %v23, %v474
  %vm484 = vcmp.eq.s32.totalorder %v24, %v474
  %vm485 = vcmp.eq.s32.totalorder %v25, %v474
  %vm486 = vcmp.eq.s32.totalorder %v26, %v474
  %vm487 = vcmp.eq.s32.totalorder %v27, %v474
  %vm488 = vcmp.eq.s32.totalorder %v28, %v474
  %vm489 = vcmp.eq.s32.totalorder %v29, %v474
  %v490 = vsel %vm475, 1, 0
  %v491 = vsel %vm476, 1, 0
  %v492 = vsel %vm477, 1, 0
  %v493 = vsel %vm478, 1, 0
  %v494 = vsel %vm479, 1, 0
  %v495 = vsel %vm480, 1, 0
  %v496 = vsel %vm481, 1, 0
  %v497 = vsel %vm482, 1, 0
  %v498 = vsel %vm483, 1, 0
  %v499 = vsel %vm484, 1, 0
  %v500 = vsel %vm485, 1, 0
  %v501 = vsel %vm486, 1, 0
  %v502 = vsel %vm487, 1, 0
  %v503 = vsel %vm488, 1, 0
  %v504 = vsel %vm489, 1, 0
  %v505 = vcvt.s32.f32 %v490
  %v506 = vcvt.s32.f32 %v491
  %v507 = vcvt.s32.f32 %v492
  %v508 = vcvt.s32.f32 %v493
  %v509 = vcvt.s32.f32 %v494
  %v510 = vcvt.s32.f32 %v495
  %v511 = vcvt.s32.f32 %v496
  %v512 = vcvt.s32.f32 %v497
  %v513 = vcvt.s32.f32 %v498
  %v514 = vcvt.s32.f32 %v499
  %v515 = vcvt.s32.f32 %v500
  %v516 = vcvt.s32.f32 %v501
  %v517 = vcvt.s32.f32 %v502
  %v518 = vcvt.s32.f32 %v503
  %v519 = vcvt.s32.f32 %v504
  %v520 = vadd.f32 %v457, %v505
  %v521 = vadd.f32 %v458, %v506
  %v522 = vadd.f32 %v459, %v507
  %v523 = vadd.f32 %v460, %v508
  %v524 = vadd.f32 %v461, %v509
  %v525 = vadd.f32 %v462, %v510
  %v526 = vadd.f32 %v463, %v511
  %v527 = vadd.f32 %v464, %v512
  %v528 = vadd.f32 %v465, %v513
  %v529 = vadd.f32 %v466, %v514
  %v530 = vadd.f32 %v467, %v515
  %v531 = vadd.f32 %v468, %v516
  %v532 = vadd.f32 %v469, %v517
  %v533 = vadd.f32 %v470, %v518
  %v534 = vadd.f32 %v471, %v519
  %535 = vset.pattern.permute.xlu0 8
  %536 = vperm.xlu0 %535, %v30
  %v537 = vpop.permute.xlu0 %536
  %vm538 = vcmp.eq.s32.totalorder %v15, %v537
  %vm539 = vcmp.eq.s32.totalorder %v16, %v537
  %vm540 = vcmp.eq.s32.totalorder %v17, %v537
  %vm541 = vcmp.eq.s32.totalorder %v18, %v537
  %vm542 = vcmp.eq.s32.totalorder %v19, %v537
  %vm543 = vcmp.eq.s32.totalorder %v20, %v537
  %vm544 = vcmp.eq.s32.totalorder %v21, %v537
  %vm545 = vcmp.eq.s32.totalorder %v22, %v537
  %vm546 = vcmp.eq.s32.totalorder %v23, %v537
  %vm547 = vcmp.eq.s32.totalorder %v24, %v537
  %vm548 = vcmp.eq.s32.totalorder %v25, %v537
  %vm549 = vcmp.eq.s32.totalorder %v26, %v537
  %vm550 = vcmp.eq.s32.totalorder %v27, %v537
  %vm551 = vcmp.eq.s32.totalorder %v28, %v537
  %vm552 = vcmp.eq.s32.totalorder %v29, %v537
  %v553 = vsel %vm538, 1, 0
  %v554 = vsel %vm539, 1, 0
  %v555 = vsel %vm540, 1, 0
  %v556 = vsel %vm541, 1, 0
  %v557 = vsel %vm542, 1, 0
  %v558 = vsel %vm543, 1, 0
  %v559 = vsel %vm544, 1, 0
  %v560 = vsel %vm545, 1, 0
  %v561 = vsel %vm546, 1, 0
  %v562 = vsel %vm547, 1, 0
  %v563 = vsel %vm548, 1, 0
  %v564 = vsel %vm549, 1, 0
  %v565 = vsel %vm550, 1, 0
  %v566 = vsel %vm551, 1, 0
  %v567 = vsel %vm552, 1, 0
  %v568 = vcvt.s32.f32 %v553
  %v569 = vcvt.s32.f32 %v554
  %v570 = vcvt.s32.f32 %v555
  %v571 = vcvt.s32.f32 %v556
  %v572 = vcvt.s32.f32 %v557
  %v573 = vcvt.s32.f32 %v558
  %v574 = vcvt.s32.f32 %v559
  %v575 = vcvt.s32.f32 %v560
  %v576 = vcvt.s32.f32 %v561
  %v577 = vcvt.s32.f32 %v562
  %v578 = vcvt.s32.f32 %v563
  %v579 = vcvt.s32.f32 %v564
  %v580 = vcvt.s32.f32 %v565
  %v581 = vcvt.s32.f32 %v566
  %v582 = vcvt.s32.f32 %v567
  %v583 = vadd.f32 %v520, %v568
  %v584 = vadd.f32 %v521, %v569
  %v585 = vadd.f32 %v522, %v570
  %v586 = vadd.f32 %v523, %v571
  %v587 = vadd.f32 %v524, %v572
  %v588 = vadd.f32 %v525, %v573
  %v589 = vadd.f32 %v526, %v574
  %v590 = vadd.f32 %v527, %v575
  %v591 = vadd.f32 %v528, %v576
  %v592 = vadd.f32 %v529, %v577
  %v593 = vadd.f32 %v530, %v578
  %v594 = vadd.f32 %v531, %v579
  %v595 = vadd.f32 %v532, %v580
  %v596 = vadd.f32 %v533, %v581
  %v597 = vadd.f32 %v534, %v582
  %598 = vset.pattern.permute.xlu0 9
  %599 = vperm.xlu0 %598, %v30
  %v600 = vpop.permute.xlu0 %599
  %vm601 = vcmp.eq.s32.totalorder %v15, %v600
  %vm602 = vcmp.eq.s32.totalorder %v16, %v600
  %vm603 = vcmp.eq.s32.totalorder %v17, %v600
  %vm604 = vcmp.eq.s32.totalorder %v18, %v600
  %vm605 = vcmp.eq.s32.totalorder %v19, %v600
  %vm606 = vcmp.eq.s32.totalorder %v20, %v600
  %vm607 = vcmp.eq.s32.totalorder %v21, %v600
  %vm608 = vcmp.eq.s32.totalorder %v22, %v600
  %vm609 = vcmp.eq.s32.totalorder %v23, %v600
  %vm610 = vcmp.eq.s32.totalorder %v24, %v600
  %vm611 = vcmp.eq.s32.totalorder %v25, %v600
  %vm612 = vcmp.eq.s32.totalorder %v26, %v600
  %vm613 = vcmp.eq.s32.totalorder %v27, %v600
  %vm614 = vcmp.eq.s32.totalorder %v28, %v600
  %vm615 = vcmp.eq.s32.totalorder %v29, %v600
  %v616 = vsel %vm601, 1, 0
  %v617 = vsel %vm602, 1, 0
  %v618 = vsel %vm603, 1, 0
  %v619 = vsel %vm604, 1, 0
  %v620 = vsel %vm605, 1, 0
  %v621 = vsel %vm606, 1, 0
  %v622 = vsel %vm607, 1, 0
  %v623 = vsel %vm608, 1, 0
  %v624 = vsel %vm609, 1, 0
  %v625 = vsel %vm610, 1, 0
  %v626 = vsel %vm611, 1, 0
  %v627 = vsel %vm612, 1, 0
  %v628 = vsel %vm613, 1, 0
  %v629 = vsel %vm614, 1, 0
  %v630 = vsel %vm615, 1, 0
  %v631 = vcvt.s32.f32 %v616
  %v632 = vcvt.s32.f32 %v617
  %v633 = vcvt.s32.f32 %v618
  %v634 = vcvt.s32.f32 %v619
  %v635 = vcvt.s32.f32 %v620
  %v636 = vcvt.s32.f32 %v621
  %v637 = vcvt.s32.f32 %v622
  %v638 = vcvt.s32.f32 %v623
  %v639 = vcvt.s32.f32 %v624
  %v640 = vcvt.s32.f32 %v625
  %v641 = vcvt.s32.f32 %v626
  %v642 = vcvt.s32.f32 %v627
  %v643 = vcvt.s32.f32 %v628
  %v644 = vcvt.s32.f32 %v629
  %v645 = vcvt.s32.f32 %v630
  %v646 = vadd.f32 %v583, %v631
  %v647 = vadd.f32 %v584, %v632
  %v648 = vadd.f32 %v585, %v633
  %v649 = vadd.f32 %v586, %v634
  %v650 = vadd.f32 %v587, %v635
  %v651 = vadd.f32 %v588, %v636
  %v652 = vadd.f32 %v589, %v637
  %v653 = vadd.f32 %v590, %v638
  %v654 = vadd.f32 %v591, %v639
  %v655 = vadd.f32 %v592, %v640
  %v656 = vadd.f32 %v593, %v641
  %v657 = vadd.f32 %v594, %v642
  %v658 = vadd.f32 %v595, %v643
  %v659 = vadd.f32 %v596, %v644
  %v660 = vadd.f32 %v597, %v645
  %661 = vset.pattern.permute.xlu0 10
  %662 = vperm.xlu0 %661, %v30
  %v663 = vpop.permute.xlu0 %662
  %vm664 = vcmp.eq.s32.totalorder %v15, %v663
  %vm665 = vcmp.eq.s32.totalorder %v16, %v663
  %vm666 = vcmp.eq.s32.totalorder %v17, %v663
  %vm667 = vcmp.eq.s32.totalorder %v18, %v663
  %vm668 = vcmp.eq.s32.totalorder %v19, %v663
  %vm669 = vcmp.eq.s32.totalorder %v20, %v663
  %vm670 = vcmp.eq.s32.totalorder %v21, %v663
  %vm671 = vcmp.eq.s32.totalorder %v22, %v663
  %vm672 = vcmp.eq.s32.totalorder %v23, %v663
  %vm673 = vcmp.eq.s32.totalorder %v24, %v663
  %vm674 = vcmp.eq.s32.totalorder %v25, %v663
  %vm675 = vcmp.eq.s32.totalorder %v26, %v663
  %vm676 = vcmp.eq.s32.totalorder %v27, %v663
  %vm677 = vcmp.eq.s32.totalorder %v28, %v663
  %vm678 = vcmp.eq.s32.totalorder %v29, %v663
  %v679 = vsel %vm664, 1, 0
  %v680 = vsel %vm665, 1, 0
  %v681 = vsel %vm666, 1, 0
  %v682 = vsel %vm667, 1, 0
  %v683 = vsel %vm668, 1, 0
  %v684 = vsel %vm669, 1, 0
  %v685 = vsel %vm670, 1, 0
  %v686 = vsel %vm671, 1, 0
  %v687 = vsel %vm672, 1, 0
  %v688 = vsel %vm673, 1, 0
  %v689 = vsel %vm674, 1, 0
  %v690 = vsel %vm675, 1, 0
  %v691 = vsel %vm676, 1, 0
  %v692 = vsel %vm677, 1, 0
  %v693 = vsel %vm678, 1, 0
  %v694 = vcvt.s32.f32 %v679
  %v695 = vcvt.s32.f32 %v680
  %v696 = vcvt.s32.f32 %v681
  %v697 = vcvt.s32.f32 %v682
  %v698 = vcvt.s32.f32 %v683
  %v699 = vcvt.s32.f32 %v684
  %v700 = vcvt.s32.f32 %v685
  %v701 = vcvt.s32.f32 %v686
  %v702 = vcvt.s32.f32 %v687
  %v703 = vcvt.s32.f32 %v688
  %v704 = vcvt.s32.f32 %v689
  %v705 = vcvt.s32.f32 %v690
  %v706 = vcvt.s32.f32 %v691
  %v707 = vcvt.s32.f32 %v692
  %v708 = vcvt.s32.f32 %v693
  %v709 = vadd.f32 %v646, %v694
  %v710 = vadd.f32 %v647, %v695
  %v711 = vadd.f32 %v648, %v696
  %v712 = vadd.f32 %v649, %v697
  %v713 = vadd.f32 %v650, %v698
  %v714 = vadd.f32 %v651, %v699
  %v715 = vadd.f32 %v652, %v700
  %v716 = vadd.f32 %v653, %v701
  %v717 = vadd.f32 %v654, %v702
  %v718 = vadd.f32 %v655, %v703
  %v719 = vadd.f32 %v656, %v704
  %v720 = vadd.f32 %v657, %v705
  %v721 = vadd.f32 %v658, %v706
  %v722 = vadd.f32 %v659, %v707
  %v723 = vadd.f32 %v660, %v708
  %724 = vset.pattern.permute.xlu0 11
  %725 = vperm.xlu0 %724, %v30
  %v726 = vpop.permute.xlu0 %725
  %vm727 = vcmp.eq.s32.totalorder %v15, %v726
  %vm728 = vcmp.eq.s32.totalorder %v16, %v726
  %vm729 = vcmp.eq.s32.totalorder %v17, %v726
  %vm730 = vcmp.eq.s32.totalorder %v18, %v726
  %vm731 = vcmp.eq.s32.totalorder %v19, %v726
  %vm732 = vcmp.eq.s32.totalorder %v20, %v726
  %vm733 = vcmp.eq.s32.totalorder %v21, %v726
  %vm734 = vcmp.eq.s32.totalorder %v22, %v726
  %vm735 = vcmp.eq.s32.totalorder %v23, %v726
  %vm736 = vcmp.eq.s32.totalorder %v24, %v726
  %vm737 = vcmp.eq.s32.totalorder %v25, %v726
  %vm738 = vcmp.eq.s32.totalorder %v26, %v726
  %vm739 = vcmp.eq.s32.totalorder %v27, %v726
  %vm740 = vcmp.eq.s32.totalorder %v28, %v726
  %vm741 = vcmp.eq.s32.totalorder %v29, %v726
  %v742 = vsel %vm727, 1, 0
  %v743 = vsel %vm728, 1, 0
  %v744 = vsel %vm729, 1, 0
  %v745 = vsel %vm730, 1, 0
  %v746 = vsel %vm731, 1, 0
  %v747 = vsel %vm732, 1, 0
  %v748 = vsel %vm733, 1, 0
  %v749 = vsel %vm734, 1, 0
  %v750 = vsel %vm735, 1, 0
  %v751 = vsel %vm736, 1, 0
  %v752 = vsel %vm737, 1, 0
  %v753 = vsel %vm738, 1, 0
  %v754 = vsel %vm739, 1, 0
  %v755 = vsel %vm740, 1, 0
  %v756 = vsel %vm741, 1, 0
  %v757 = vcvt.s32.f32 %v742
  %v758 = vcvt.s32.f32 %v743
  %v759 = vcvt.s32.f32 %v744
  %v760 = vcvt.s32.f32 %v745
  %v761 = vcvt.s32.f32 %v746
  %v762 = vcvt.s32.f32 %v747
  %v763 = vcvt.s32.f32 %v748
  %v764 = vcvt.s32.f32 %v749
  %v765 = vcvt.s32.f32 %v750
  %v766 = vcvt.s32.f32 %v751
  %v767 = vcvt.s32.f32 %v752
  %v768 = vcvt.s32.f32 %v753
  %v769 = vcvt.s32.f32 %v754
  %v770 = vcvt.s32.f32 %v755
  %v771 = vcvt.s32.f32 %v756
  %v772 = vadd.f32 %v709, %v757
  %v773 = vadd.f32 %v710, %v758
  %v774 = vadd.f32 %v711, %v759
  %v775 = vadd.f32 %v712, %v760
  %v776 = vadd.f32 %v713, %v761
  %v777 = vadd.f32 %v714, %v762
  %v778 = vadd.f32 %v715, %v763
  %v779 = vadd.f32 %v716, %v764
  %v780 = vadd.f32 %v717, %v765
  %v781 = vadd.f32 %v718, %v766
  %v782 = vadd.f32 %v719, %v767
  %v783 = vadd.f32 %v720, %v768
  %v784 = vadd.f32 %v721, %v769
  %v785 = vadd.f32 %v722, %v770
  %v786 = vadd.f32 %v723, %v771
  %v787 = vld [vmem:[%s1] sm:$0xff]
  %v788 = vld [vmem:[%s1 + $0x8] sm:$0xff]
  %v789 = vld [vmem:[%s1 + $0x10] sm:$0xff]
  %v790 = vld [vmem:[%s1 + $0x18] sm:$0xff]
  %v791 = vld [vmem:[%s1 + $0x20] sm:$0xff]
  %v792 = vld [vmem:[%s1 + $0x28] sm:$0xff]
  %v793 = vld [vmem:[%s1 + $0x30] sm:$0xff]
  %v794 = vld [vmem:[%s1 + $0x38] sm:$0xff]
  %v795 = vld [vmem:[%s1 + $0x40] sm:$0xff]
  %v796 = vld [vmem:[%s1 + $0x48] sm:$0xff]
  %v797 = vld [vmem:[%s1 + $0x50] sm:$0xff]
  %v798 = vld [vmem:[%s1 + $0x58] sm:$0xff]
  %v799 = vld [vmem:[%s1 + $0x60] sm:$0xff]
  %v800 = vld [vmem:[%s1 + $0x68] sm:$0xff]
  %v801 = vld [vmem:[%s1 + $0x70] sm:$0xff]
  %v802 = vld [vmem:[%s1 + $0x78] sm:$0xff]
  %v803 = vld [vmem:[%s1 + $0x80] sm:$0xff]
  %v804 = vld [vmem:[%s1 + $0x88] sm:$0xff]
  %v805 = vld [vmem:[%s1 + $0x90] sm:$0xff]
  %v806 = vld [vmem:[%s1 + $0x98] sm:$0xff]
  %v807 = vld [vmem:[%s1 + $0xa0] sm:$0xff]
  %v808 = vld [vmem:[%s1 + $0xa8] sm:$0xff]
  %v809 = vld [vmem:[%s1 + $0xb0] sm:$0xff]
  %v810 = vld [vmem:[%s1 + $0xb8] sm:$0xff]
  %v811 = vld [vmem:[%s1 + $0xc0] sm:$0xff]
  %v812 = vld [vmem:[%s1 + $0xc8] sm:$0xff]
  %v813 = vld [vmem:[%s1 + $0xd0] sm:$0xff]
  %v814 = vld [vmem:[%s1 + $0xd8] sm:$0xff]
  %v815 = vld [vmem:[%s1 + $0xe0] sm:$0xff]
  %v816 = vld [vmem:[%s1 + $0xe8] sm:$0xff]
  %v817 = vld [vmem:[%s1 + $0xf0] sm:$0xff]
  %v818 = vld [vmem:[%s1 + $0xf8] sm:$0xff]
  %v819 = vld [vmem:[%s1 + $0x100] sm:$0xff]
  %v820 = vld [vmem:[%s1 + $0x108] sm:$0xff]
  %v821 = vld [vmem:[%s1 + $0x110] sm:$0xff]
  %v822 = vld [vmem:[%s1 + $0x118] sm:$0xff]
  %v823 = vld [vmem:[%s1 + $0x120] sm:$0xff]
  %v824 = vld [vmem:[%s1 + $0x128] sm:$0xff]
  %v825 = vld [vmem:[%s1 + $0x130] sm:$0xff]
  %v826 = vld [vmem:[%s1 + $0x138] sm:$0xff]
  %v827 = vld [vmem:[%s1 + $0x140] sm:$0xff]
  %v828 = vld [vmem:[%s1 + $0x148] sm:$0xff]
  %v829 = vld [vmem:[%s1 + $0x150] sm:$0xff]
  %v830 = vld [vmem:[%s1 + $0x158] sm:$0xff]
  %v831 = vld [vmem:[%s1 + $0x160] sm:$0xff]
  %v832 = vld [vmem:[%s1 + $0x168] sm:$0xff]
  %v833 = vld [vmem:[%s1 + $0x170] sm:$0xff]
  %v834 = vld [vmem:[%s1 + $0x178] sm:$0xff]
  %v835 = vld [vmem:[%s1 + $0x180] sm:$0xff]
  %v836 = vld [vmem:[%s1 + $0x188] sm:$0xff]
  %v837 = vld [vmem:[%s1 + $0x190] sm:$0xff]
  %v838 = vld [vmem:[%s1 + $0x198] sm:$0xff]
  %v839 = vld [vmem:[%s1 + $0x1a0] sm:$0xff]
  %v840 = vld [vmem:[%s1 + $0x1a8] sm:$0xff]
  %v841 = vld [vmem:[%s1 + $0x1b0] sm:$0xff]
  %v842 = vld [vmem:[%s1 + $0x1b8] sm:$0xff]
  %v843 = vld [vmem:[%s1 + $0x1c0] sm:$0xff]
  %v844 = vld [vmem:[%s1 + $0x1c8] sm:$0xff]
  %v845 = vld [vmem:[%s1 + $0x1d0] sm:$0xff]
  %v846 = vld [vmem:[%s1 + $0x1d8] sm:$0xff]
  %v847 = vld [vmem:[%s1 + $0x1e0] sm:$0xff]
  %v848 = vld [vmem:[%s1 + $0x1e8] sm:$0xff]
  %v849 = vld [vmem:[%s1 + $0x1f0] sm:$0xff]
  %v850 = vld [vmem:[%s1 + $0x1f8] sm:$0xff]
  %v851 = vld [vmem:[%s1 + $0x200] sm:$0xff]
  %v852 = vld [vmem:[%s1 + $0x208] sm:$0xff]
  %v853 = vld [vmem:[%s1 + $0x210] sm:$0xff]
  %v854 = vld [vmem:[%s1 + $0x218] sm:$0xff]
  %v855 = vld [vmem:[%s1 + $0x220] sm:$0xff]
  %v856 = vld [vmem:[%s1 + $0x228] sm:$0xff]
  %v857 = vld [vmem:[%s1 + $0x230] sm:$0xff]
  %v858 = vld [vmem:[%s1 + $0x238] sm:$0xff]
  %v859 = vld [vmem:[%s1 + $0x240] sm:$0xff]
  %v860 = vld [vmem:[%s1 + $0x248] sm:$0xff]
  %v861 = vld [vmem:[%s1 + $0x250] sm:$0xff]
  %v862 = vld [vmem:[%s1 + $0x258] sm:$0xff]
  %v863 = vld [vmem:[%s1 + $0x260] sm:$0xff]
  %v864 = vld [vmem:[%s1 + $0x268] sm:$0xff]
  %v865 = vld [vmem:[%s1 + $0x270] sm:$0xff]
  %v866 = vld [vmem:[%s1 + $0x278] sm:$0xff]
  %v867 = vld [vmem:[%s1 + $0x280] sm:$0xff]
  %v868 = vld [vmem:[%s1 + $0x288] sm:$0xff]
  %v869 = vld [vmem:[%s1 + $0x290] sm:$0xff]
  %v870 = vld [vmem:[%s1 + $0x298] sm:$0xff]
  %v871 = vld [vmem:[%s1 + $0x2a0] sm:$0xff]
  %v872 = vld [vmem:[%s1 + $0x2a8] sm:$0xff]
  %v873 = vld [vmem:[%s1 + $0x2b0] sm:$0xff]
  %v874 = vld [vmem:[%s1 + $0x2b8] sm:$0xff]
  %v875 = vld [vmem:[%s1 + $0x2c0] sm:$0xff]
  %v876 = vld [vmem:[%s1 + $0x2c8] sm:$0xff]
  %v877 = vld [vmem:[%s1 + $0x2d0] sm:$0xff]
  %v878 = vld [vmem:[%s1 + $0x2d8] sm:$0xff]
  %v879 = vld [vmem:[%s1 + $0x2e0] sm:$0xff]
  %v880 = vld [vmem:[%s1 + $0x2e8] sm:$0xff]
  %v881 = vld [vmem:[%s1 + $0x2f0] sm:$0xff]
  %v882 = vld [vmem:[%s1 + $0x2f8] sm:$0xff]
  %v883 = vld [vmem:[%s1 + $0x300] sm:$0xff]
  %v884 = vld [vmem:[%s1 + $0x308] sm:$0xff]
  %v885 = vld [vmem:[%s1 + $0x310] sm:$0xff]
  %v886 = vld [vmem:[%s1 + $0x318] sm:$0xff]
  %v887 = vld [vmem:[%s1 + $0x320] sm:$0xff]
  %v888 = vld [vmem:[%s1 + $0x328] sm:$0xff]
  %v889 = vld [vmem:[%s1 + $0x330] sm:$0xff]
  %v890 = vld [vmem:[%s1 + $0x338] sm:$0xff]
  %v891 = vld [vmem:[%s1 + $0x340] sm:$0xff]
  %v892 = vld [vmem:[%s1 + $0x348] sm:$0xff]
  %v893 = vld [vmem:[%s1 + $0x350] sm:$0xff]
  %v894 = vld [vmem:[%s1 + $0x358] sm:$0xff]
  %v895 = vld [vmem:[%s1 + $0x360] sm:$0xff]
  %v896 = vld [vmem:[%s1 + $0x368] sm:$0xff]
  %v897 = vld [vmem:[%s1 + $0x370] sm:$0xff]
  %v898 = vld [vmem:[%s1 + $0x378] sm:$0xff]
  %v899 = vld [vmem:[%s1 + $0x380] sm:$0xff]
  %v900 = vld [vmem:[%s1 + $0x388] sm:$0xff]
  %v901 = vld [vmem:[%s1 + $0x390] sm:$0xff]
  %v902 = vld [vmem:[%s1 + $0x398] sm:$0xff]
  %v903 = vld [vmem:[%s1 + $0x3a0] sm:$0xff]
  %v904 = vld [vmem:[%s1 + $0x3a8] sm:$0xff]
  %v905 = vld [vmem:[%s1 + $0x3b0] sm:$0xff]
  %v906 = vld [vmem:[%s1 + $0x3b8] sm:$0xff]
  %v907 = vld [vmem:[%s1 + $0x3c0] sm:$0xff]
  %v908 = vld [vmem:[%s1 + $0x3c8] sm:$0xff]
  %v909 = vld [vmem:[%s1 + $0x3d0] sm:$0xff]
  %v910 = vld [vmem:[%s1 + $0x3d8] sm:$0xff]
  %v911 = vld [vmem:[%s1 + $0x3e0] sm:$0xff]
  %v912 = vld [vmem:[%s1 + $0x3e8] sm:$0xff]
  %v913 = vld [vmem:[%s1 + $0x3f0] sm:$0xff]
  %v914 = vld [vmem:[%s1 + $0x3f8] sm:$0xff]
  %v915 = vld [vmem:[%s1 + $0x400] sm:$0xff]
  %v916 = vld [vmem:[%s1 + $0x408] sm:$0xff]
  %v917 = vld [vmem:[%s1 + $0x410] sm:$0xff]
  %v918 = vld [vmem:[%s1 + $0x418] sm:$0xff]
  %v919 = vld [vmem:[%s1 + $0x420] sm:$0xff]
  %v920 = vld [vmem:[%s1 + $0x428] sm:$0xff]
  %v921 = vld [vmem:[%s1 + $0x430] sm:$0xff]
  %v922 = vld [vmem:[%s1 + $0x438] sm:$0xff]
  %v923 = vld [vmem:[%s1 + $0x440] sm:$0xff]
  %v924 = vld [vmem:[%s1 + $0x448] sm:$0xff]
  %v925 = vld [vmem:[%s1 + $0x450] sm:$0xff]
  %v926 = vld [vmem:[%s1 + $0x458] sm:$0xff]
  %v927 = vld [vmem:[%s1 + $0x460] sm:$0xff]
  %v928 = vld [vmem:[%s1 + $0x468] sm:$0xff]
  %v929 = vld [vmem:[%s1 + $0x470] sm:$0xff]
  %v930 = vld [vmem:[%s1 + $0x478] sm:$0xff]
  %v931 = vld [vmem:[%s1 + $0x480] sm:$0xff]
  %v932 = vld [vmem:[%s1 + $0x488] sm:$0xff]
  %v933 = vld [vmem:[%s1 + $0x490] sm:$0xff]
  %v934 = vld [vmem:[%s1 + $0x498] sm:$0xff]
  %v935 = vld [vmem:[%s1 + $0x4a0] sm:$0xff]
  %v936 = vld [vmem:[%s1 + $0x4a8] sm:$0xff]
  %v937 = vld [vmem:[%s1 + $0x4b0] sm:$0xff]
  %v938 = vld [vmem:[%s1 + $0x4b8] sm:$0xff]
  %v939 = vld [vmem:[%s1 + $0x4c0] sm:$0xff]
  %v940 = vld [vmem:[%s1 + $0x4c8] sm:$0xff]
  %v941 = vld [vmem:[%s1 + $0x4d0] sm:$0xff]
  %v942 = vld [vmem:[%s1 + $0x4d8] sm:$0xff]
  %v943 = vld [vmem:[%s1 + $0x4e0] sm:$0xff]
  %v944 = vld [vmem:[%s1 + $0x4e8] sm:$0xff]
  %v945 = vld [vmem:[%s1 + $0x4f0] sm:$0xff]
  %v946 = vld [vmem:[%s1 + $0x4f8] sm:$0xff]
  %v947 = vld [vmem:[%s1 + $0x500] sm:$0xff]
  %v948 = vld [vmem:[%s1 + $0x508] sm:$0xff]
  %v949 = vld [vmem:[%s1 + $0x510] sm:$0xff]
  %v950 = vld [vmem:[%s1 + $0x518] sm:$0xff]
  %v951 = vld [vmem:[%s1 + $0x520] sm:$0xff]
  %v952 = vld [vmem:[%s1 + $0x528] sm:$0xff]
  %v953 = vld [vmem:[%s1 + $0x530] sm:$0xff]
  %v954 = vld [vmem:[%s1 + $0x538] sm:$0xff]
  %v955 = vld [vmem:[%s1 + $0x540] sm:$0xff]
  %v956 = vld [vmem:[%s1 + $0x548] sm:$0xff]
  %v957 = vld [vmem:[%s1 + $0x550] sm:$0xff]
  %v958 = vld [vmem:[%s1 + $0x558] sm:$0xff]
  %v959 = vld [vmem:[%s1 + $0x560] sm:$0xff]
  %v960 = vld [vmem:[%s1 + $0x568] sm:$0xff]
  %v961 = vld [vmem:[%s1 + $0x570] sm:$0xff]
  %v962 = vld [vmem:[%s1 + $0x578] sm:$0xff]
  %v963 = vld [vmem:[%s1 + $0x580] sm:$0xff]
  %v964 = vld [vmem:[%s1 + $0x588] sm:$0xff]
  %v965 = vld [vmem:[%s1 + $0x590] sm:$0xff]
  %v966 = vld [vmem:[%s1 + $0x598] sm:$0xff]
  %v967 = vld [vmem:[%s1 + $0x5a0] sm:$0xff]
  %v968 = vld [vmem:[%s1 + $0x5a8] sm:$0xff]
  %v969 = vld [vmem:[%s1 + $0x5b0] sm:$0xff]
  %v970 = vld [vmem:[%s1 + $0x5b8] sm:$0xff]
  %v971 = vld [vmem:[%s1 + $0x5c0] sm:$0xff]
  %v972 = vld [vmem:[%s1 + $0x5c8] sm:$0xff]
  %v973 = vld [vmem:[%s1 + $0x5d0] sm:$0xff]
  %v974 = vld [vmem:[%s1 + $0x5d8] sm:$0xff]
  %v975 = vld [vmem:[%s1 + $0x5e0] sm:$0xff]
  %v976 = vld [vmem:[%s1 + $0x5e8] sm:$0xff]
  %v977 = vld [vmem:[%s1 + $0x5f0] sm:$0xff]
  %v978 = vld [vmem:[%s1 + $0x5f8] sm:$0xff]
  %v979 = vld [vmem:[%s1 + $0x600] sm:$0xff]
  %v980 = vld [vmem:[%s1 + $0x608] sm:$0xff]
  %v981 = vld [vmem:[%s1 + $0x610] sm:$0xff]
  %v982 = vld [vmem:[%s1 + $0x618] sm:$0xff]
  %v983 = vld [vmem:[%s1 + $0x620] sm:$0xff]
  %v984 = vld [vmem:[%s1 + $0x628] sm:$0xff]
  %v985 = vld [vmem:[%s1 + $0x630] sm:$0xff]
  %v986 = vld [vmem:[%s1 + $0x638] sm:$0xff]
  %v987 = vld [vmem:[%s1 + $0x640] sm:$0xff]
  %v988 = vld [vmem:[%s1 + $0x648] sm:$0xff]
  %v989 = vld [vmem:[%s1 + $0x650] sm:$0xff]
  %v990 = vld [vmem:[%s1 + $0x658] sm:$0xff]
  %v991 = vld [vmem:[%s1 + $0x660] sm:$0xff]
  %v992 = vld [vmem:[%s1 + $0x668] sm:$0xff]
  %v993 = vld [vmem:[%s1 + $0x670] sm:$0xff]
  %v994 = vld [vmem:[%s1 + $0x678] sm:$0xff]
  %v995 = vld [vmem:[%s1 + $0x680] sm:$0xff]
  %v996 = vld [vmem:[%s1 + $0x688] sm:$0xff]
  %v997 = vld [vmem:[%s1 + $0x690] sm:$0xff]
  %v998 = vld [vmem:[%s1 + $0x698] sm:$0xff]
  %v999 = vld [vmem:[%s1 + $0x6a0] sm:$0xff]
  %v1000 = vld [vmem:[%s1 + $0x6a8] sm:$0xff]
  %v1001 = vld [vmem:[%s1 + $0x6b0] sm:$0xff]
  %v1002 = vld [vmem:[%s1 + $0x6b8] sm:$0xff]
  %v1003 = vld [vmem:[%s1 + $0x6c0] sm:$0xff]
  %v1004 = vld [vmem:[%s1 + $0x6c8] sm:$0xff]
  %v1005 = vld [vmem:[%s1 + $0x6d0] sm:$0xff]
  %v1006 = vld [vmem:[%s1 + $0x6d8] sm:$0xff]
  %v1007 = vld [vmem:[%s1 + $0x6e0] sm:$0xff]
  %v1008 = vld [vmem:[%s1 + $0x6e8] sm:$0xff]
  %v1009 = vld [vmem:[%s1 + $0x6f0] sm:$0xff]
  %v1010 = vld [vmem:[%s1 + $0x6f8] sm:$0xff]
  %v1011 = vld [vmem:[%s1 + $0x700] sm:$0xff]
  %v1012 = vld [vmem:[%s1 + $0x708] sm:$0xff]
  %v1013 = vld [vmem:[%s1 + $0x710] sm:$0xff]
  %v1014 = vld [vmem:[%s1 + $0x718] sm:$0xff]
  %v1015 = vld [vmem:[%s1 + $0x720] sm:$0xff]
  %v1016 = vld [vmem:[%s1 + $0x728] sm:$0xff]
  %v1017 = vld [vmem:[%s1 + $0x730] sm:$0xff]
  %v1018 = vld [vmem:[%s1 + $0x738] sm:$0xff]
  %v1019 = vld [vmem:[%s1 + $0x740] sm:$0xff]
  %v1020 = vld [vmem:[%s1 + $0x748] sm:$0xff]
  %v1021 = vld [vmem:[%s1 + $0x750] sm:$0xff]
  %v1022 = vld [vmem:[%s1 + $0x758] sm:$0xff]
  %v1023 = vld [vmem:[%s1 + $0x760] sm:$0xff]
  %v1024 = vld [vmem:[%s1 + $0x768] sm:$0xff]
  %v1025 = vld [vmem:[%s1 + $0x770] sm:$0xff]
  %v1026 = vld [vmem:[%s1 + $0x778] sm:$0xff]
  %v1027 = vld [vmem:[%s2] sm:$0x1]
  %v1029 = vlaneseq
  %v1030 = vshrl.u32 %v1029, 7
  %v1031 = vsub.s32 0, %v1030
  %v1032 = vrot.slane %v1027, %v1031
  %1034 = vmatprep.subr.mxu0 0.0
  %1035 = vmatpush1.msra.mxu0 %v802
  %1036 = vmatprep.subr.mxu0 0.0
  %1037 = vmatpush1.msra.mxu0 %v801
  %1038 = vmatprep.subr.mxu0 0.0
  %1039 = vmatpush1.msra.mxu0 %v800
  %1040 = vmatprep.subr.mxu0 0.0
  %1041 = vmatpush1.msra.mxu0 %v799
  %1042 = vmatprep.subr.mxu0 0.0
  %1043 = vmatpush1.msra.mxu0 %v798
  %1044 = vmatprep.subr.mxu0 0.0
  %1045 = vmatpush1.msra.mxu0 %v797
  %1046 = vmatprep.subr.mxu0 0.0
  %1047 = vmatpush1.msra.mxu0 %v796
  %1048 = vmatprep.subr.mxu0 0.0
  %1049 = vmatpush1.msra.mxu0 %v795
  %1050 = vmatprep.subr.mxu0 0.0
  %1051 = vmatpush1.msra.mxu0 %v794
  %1052 = vmatprep.subr.mxu0 0.0
  %1053 = vmatpush1.msra.mxu0 %v793
  %1054 = vmatprep.subr.mxu0 0.0
  %1055 = vmatpush1.msra.mxu0 %v792
  %1056 = vmatprep.subr.mxu0 0.0
  %1057 = vmatpush1.msra.mxu0 %v791
  %1058 = vmatprep.subr.mxu0 0.0
  %1059 = vmatpush1.msra.mxu0 %v790
  %1060 = vmatprep.subr.mxu0 0.0
  %1061 = vmatpush1.msra.mxu0 %v789
  %1062 = vmatprep.subr.mxu0 0.0
  %1063 = vmatpush1.msra.mxu0 %v788
  %1064 = vmatprep.subr.mxu0 0.0
  %1065 = vmatpush1.msra.mxu0 %v787
  %1066 = vmatprep.subr.mxu0 0.0
  %1067 = vmatpush2.msra.mxu0 %v818
  %1068 = vmatprep.subr.mxu0 0.0
  %1069 = vmatpush2.msra.mxu0 %v817
  %1070 = vmatprep.subr.mxu0 0.0
  %1071 = vmatpush2.msra.mxu0 %v816
  %1072 = vmatprep.subr.mxu0 0.0
  %1073 = vmatpush2.msra.mxu0 %v815
  %1074 = vmatprep.subr.mxu0 0.0
  %1075 = vmatpush2.msra.mxu0 %v814
  %1076 = vmatprep.subr.mxu0 0.0
  %1077 = vmatpush2.msra.mxu0 %v813
  %1078 = vmatprep.subr.mxu0 0.0
  %1079 = vmatpush2.msra.mxu0 %v812
  %1080 = vmatprep.subr.mxu0 0.0
  %1081 = vmatpush2.msra.mxu0 %v811
  %1082 = vmatprep.subr.mxu0 0.0
  %1083 = vmatpush2.msra.mxu0 %v810
  %1084 = vmatprep.subr.mxu0 0.0
  %1085 = vmatpush2.msra.mxu0 %v809
  %1086 = vmatprep.subr.mxu0 0.0
  %1087 = vmatpush2.msra.mxu0 %v808
  %1088 = vmatprep.subr.mxu0 0.0
  %1089 = vmatpush2.msra.mxu0 %v807
  %1090 = vmatprep.subr.mxu0 0.0
  %1091 = vmatpush2.msra.mxu0 %v806
  %1092 = vmatprep.subr.mxu0 0.0
  %1093 = vmatpush2.msra.mxu0 %v805
  %1094 = vmatprep.subr.mxu0 0.0
  %1095 = vmatpush2.msra.mxu0 %v804
  %1096 = vmatprep.subr.mxu0 0.0
  %1097 = vmatpush2.msra.mxu0 %v803
  %1098 = vmatprep.mubr.f32.mxu0 %v773
  %1099 = vmatmul.mubr.f32.gmra.mxu0 %v772
  %v1100 = vpop.f32.mrf.mxu0
  %v1101 = vadd.f32 %v1032, %v1100
  %v1102 = vpop.f32.mrf.mxu0
  %1103 = vdwg.mxu0
  %1104 = vmatprep.subr.mxu0 0.0
  %1105 = vmatpush1.msra.mxu0 %v834
  %1106 = vmatprep.subr.mxu0 0.0
  %1107 = vmatpush1.msra.mxu0 %v833
  %1108 = vmatprep.subr.mxu0 0.0
  %1109 = vmatpush1.msra.mxu0 %v832
  %1110 = vmatprep.subr.mxu0 0.0
  %1111 = vmatpush1.msra.mxu0 %v831
  %1112 = vmatprep.subr.mxu0 0.0
  %1113 = vmatpush1.msra.mxu0 %v830
  %1114 = vmatprep.subr.mxu0 0.0
  %1115 = vmatpush1.msra.mxu0 %v829
  %1116 = vmatprep.subr.mxu0 0.0
  %1117 = vmatpush1.msra.mxu0 %v828
  %1118 = vmatprep.subr.mxu0 0.0
  %1119 = vmatpush1.msra.mxu0 %v827
  %1120 = vmatprep.subr.mxu0 0.0
  %1121 = vmatpush1.msra.mxu0 %v826
  %1122 = vmatprep.subr.mxu0 0.0
  %1123 = vmatpush1.msra.mxu0 %v825
  %1124 = vmatprep.subr.mxu0 0.0
  %1125 = vmatpush1.msra.mxu0 %v824
  %1126 = vmatprep.subr.mxu0 0.0
  %1127 = vmatpush1.msra.mxu0 %v823
  %1128 = vmatprep.subr.mxu0 0.0
  %1129 = vmatpush1.msra.mxu0 %v822
  %1130 = vmatprep.subr.mxu0 0.0
  %1131 = vmatpush1.msra.mxu0 %v821
  %1132 = vmatprep.subr.mxu0 0.0
  %1133 = vmatpush1.msra.mxu0 %v820
  %1134 = vmatprep.subr.mxu0 0.0
  %1135 = vmatpush1.msra.mxu0 %v819
  %1136 = vmatprep.subr.mxu0 0.0
  %1137 = vmatpush2.msra.mxu0 %v850
  %1138 = vmatprep.subr.mxu0 0.0
  %1139 = vmatpush2.msra.mxu0 %v849
  %1140 = vmatprep.subr.mxu0 0.0
  %1141 = vmatpush2.msra.mxu0 %v848
  %1142 = vmatprep.subr.mxu0 0.0
  %1143 = vmatpush2.msra.mxu0 %v847
  %1144 = vmatprep.subr.mxu0 0.0
  %1145 = vmatpush2.msra.mxu0 %v846
  %1146 = vmatprep.subr.mxu0 0.0
  %1147 = vmatpush2.msra.mxu0 %v845
  %1148 = vmatprep.subr.mxu0 0.0
  %1149 = vmatpush2.msra.mxu0 %v844
  %1150 = vmatprep.subr.mxu0 0.0
  %1151 = vmatpush2.msra.mxu0 %v843
  %1152 = vmatprep.subr.mxu0 0.0
  %1153 = vmatpush2.msra.mxu0 %v842
  %1154 = vmatprep.subr.mxu0 0.0
  %1155 = vmatpush2.msra.mxu0 %v841
  %1156 = vmatprep.subr.mxu0 0.0
  %1157 = vmatpush2.msra.mxu0 %v840
  %1158 = vmatprep.subr.mxu0 0.0
  %1159 = vmatpush2.msra.mxu0 %v839
  %1160 = vmatprep.subr.mxu0 0.0
  %1161 = vmatpush2.msra.mxu0 %v838
  %1162 = vmatprep.subr.mxu0 0.0
  %1163 = vmatpush2.msra.mxu0 %v837
  %1164 = vmatprep.subr.mxu0 0.0
  %1165 = vmatpush2.msra.mxu0 %v836
  %1166 = vmatprep.subr.mxu0 0.0
  %1167 = vmatpush2.msra.mxu0 %v835
  %1168 = vmatprep.mubr.f32.mxu0 %v775
  %1169 = vmatmul.mubr.f32.gmra.mxu0 %v774
  %v1170 = vpop.f32.mrf.mxu0
  %v1171 = vadd.f32 %v1101, %v1170
  %v1172 = vpop.f32.mrf.mxu0
  %1173 = vdwg.mxu0
  %1174 = vmatprep.subr.mxu0 0.0
  %1175 = vmatpush1.msra.mxu0 %v866
  %1176 = vmatprep.subr.mxu0 0.0
  %1177 = vmatpush1.msra.mxu0 %v865
  %1178 = vmatprep.subr.mxu0 0.0
  %1179 = vmatpush1.msra.mxu0 %v864
  %1180 = vmatprep.subr.mxu0 0.0
  %1181 = vmatpush1.msra.mxu0 %v863
  %1182 = vmatprep.subr.mxu0 0.0
  %1183 = vmatpush1.msra.mxu0 %v862
  %1184 = vmatprep.subr.mxu0 0.0
  %1185 = vmatpush1.msra.mxu0 %v861
  %1186 = vmatprep.subr.mxu0 0.0
  %1187 = vmatpush1.msra.mxu0 %v860
  %1188 = vmatprep.subr.mxu0 0.0
  %1189 = vmatpush1.msra.mxu0 %v859
  %1190 = vmatprep.subr.mxu0 0.0
  %1191 = vmatpush1.msra.mxu0 %v858
  %1192 = vmatprep.subr.mxu0 0.0
  %1193 = vmatpush1.msra.mxu0 %v857
  %1194 = vmatprep.subr.mxu0 0.0
  %1195 = vmatpush1.msra.mxu0 %v856
  %1196 = vmatprep.subr.mxu0 0.0
  %1197 = vmatpush1.msra.mxu0 %v855
  %1198 = vmatprep.subr.mxu0 0.0
  %1199 = vmatpush1.msra.mxu0 %v854
  %1200 = vmatprep.subr.mxu0 0.0
  %1201 = vmatpush1.msra.mxu0 %v853
  %1202 = vmatprep.subr.mxu0 0.0
  %1203 = vmatpush1.msra.mxu0 %v852
  %1204 = vmatprep.subr.mxu0 0.0
  %1205 = vmatpush1.msra.mxu0 %v851
  %1206 = vmatprep.subr.mxu0 0.0
  %1207 = vmatpush2.msra.mxu0 %v882
  %1208 = vmatprep.subr.mxu0 0.0
  %1209 = vmatpush2.msra.mxu0 %v881
  %1210 = vmatprep.subr.mxu0 0.0
  %1211 = vmatpush2.msra.mxu0 %v880
  %1212 = vmatprep.subr.mxu0 0.0
  %1213 = vmatpush2.msra.mxu0 %v879
  %1214 = vmatprep.subr.mxu0 0.0
  %1215 = vmatpush2.msra.mxu0 %v878
  %1216 = vmatprep.subr.mxu0 0.0
  %1217 = vmatpush2.msra.mxu0 %v877
  %1218 = vmatprep.subr.mxu0 0.0
  %1219 = vmatpush2.msra.mxu0 %v876
  %1220 = vmatprep.subr.mxu0 0.0
  %1221 = vmatpush2.msra.mxu0 %v875
  %1222 = vmatprep.subr.mxu0 0.0
  %1223 = vmatpush2.msra.mxu0 %v874
  %1224 = vmatprep.subr.mxu0 0.0
  %1225 = vmatpush2.msra.mxu0 %v873
  %1226 = vmatprep.subr.mxu0 0.0
  %1227 = vmatpush2.msra.mxu0 %v872
  %1228 = vmatprep.subr.mxu0 0.0
  %1229 = vmatpush2.msra.mxu0 %v871
  %1230 = vmatprep.subr.mxu0 0.0
  %1231 = vmatpush2.msra.mxu0 %v870
  %1232 = vmatprep.subr.mxu0 0.0
  %1233 = vmatpush2.msra.mxu0 %v869
  %1234 = vmatprep.subr.mxu0 0.0
  %1235 = vmatpush2.msra.mxu0 %v868
  %1236 = vmatprep.subr.mxu0 0.0
  %1237 = vmatpush2.msra.mxu0 %v867
  %1238 = vmatprep.mubr.f32.mxu0 %v777
  %1239 = vmatmul.mubr.f32.gmra.mxu0 %v776
  %v1240 = vpop.f32.mrf.mxu0
  %v1241 = vadd.f32 %v1171, %v1240
  %v1242 = vpop.f32.mrf.mxu0
  %1243 = vdwg.mxu0
  %1244 = vmatprep.subr.mxu0 0.0
  %1245 = vmatpush1.msra.mxu0 %v898
  %1246 = vmatprep.subr.mxu0 0.0
  %1247 = vmatpush1.msra.mxu0 %v897
  %1248 = vmatprep.subr.mxu0 0.0
  %1249 = vmatpush1.msra.mxu0 %v896
  %1250 = vmatprep.subr.mxu0 0.0
  %1251 = vmatpush1.msra.mxu0 %v895
  %1252 = vmatprep.subr.mxu0 0.0
  %1253 = vmatpush1.msra.mxu0 %v894
  %1254 = vmatprep.subr.mxu0 0.0
  %1255 = vmatpush1.msra.mxu0 %v893
  %1256 = vmatprep.subr.mxu0 0.0
  %1257 = vmatpush1.msra.mxu0 %v892
  %1258 = vmatprep.subr.mxu0 0.0
  %1259 = vmatpush1.msra.mxu0 %v891
  %1260 = vmatprep.subr.mxu0 0.0
  %1261 = vmatpush1.msra.mxu0 %v890
  %1262 = vmatprep.subr.mxu0 0.0
  %1263 = vmatpush1.msra.mxu0 %v889
  %1264 = vmatprep.subr.mxu0 0.0
  %1265 = vmatpush1.msra.mxu0 %v888
  %1266 = vmatprep.subr.mxu0 0.0
  %1267 = vmatpush1.msra.mxu0 %v887
  %1268 = vmatprep.subr.mxu0 0.0
  %1269 = vmatpush1.msra.mxu0 %v886
  %1270 = vmatprep.subr.mxu0 0.0
  %1271 = vmatpush1.msra.mxu0 %v885
  %1272 = vmatprep.subr.mxu0 0.0
  %1273 = vmatpush1.msra.mxu0 %v884
  %1274 = vmatprep.subr.mxu0 0.0
  %1275 = vmatpush1.msra.mxu0 %v883
  %1276 = vmatprep.subr.mxu0 0.0
  %1277 = vmatpush2.msra.mxu0 %v914
  %1278 = vmatprep.subr.mxu0 0.0
  %1279 = vmatpush2.msra.mxu0 %v913
  %1280 = vmatprep.subr.mxu0 0.0
  %1281 = vmatpush2.msra.mxu0 %v912
  %1282 = vmatprep.subr.mxu0 0.0
  %1283 = vmatpush2.msra.mxu0 %v911
  %1284 = vmatprep.subr.mxu0 0.0
  %1285 = vmatpush2.msra.mxu0 %v910
  %1286 = vmatprep.subr.mxu0 0.0
  %1287 = vmatpush2.msra.mxu0 %v909
  %1288 = vmatprep.subr.mxu0 0.0
  %1289 = vmatpush2.msra.mxu0 %v908
  %1290 = vmatprep.subr.mxu0 0.0
  %1291 = vmatpush2.msra.mxu0 %v907
  %1292 = vmatprep.subr.mxu0 0.0
  %1293 = vmatpush2.msra.mxu0 %v906
  %1294 = vmatprep.subr.mxu0 0.0
  %1295 = vmatpush2.msra.mxu0 %v905
  %1296 = vmatprep.subr.mxu0 0.0
  %1297 = vmatpush2.msra.mxu0 %v904
  %1298 = vmatprep.subr.mxu0 0.0
  %1299 = vmatpush2.msra.mxu0 %v903
  %1300 = vmatprep.subr.mxu0 0.0
  %1301 = vmatpush2.msra.mxu0 %v902
  %1302 = vmatprep.subr.mxu0 0.0
  %1303 = vmatpush2.msra.mxu0 %v901
  %1304 = vmatprep.subr.mxu0 0.0
  %1305 = vmatpush2.msra.mxu0 %v900
  %1306 = vmatprep.subr.mxu0 0.0
  %1307 = vmatpush2.msra.mxu0 %v899
  %1308 = vmatprep.mubr.f32.mxu0 %v779
  %1309 = vmatmul.mubr.f32.gmra.mxu0 %v778
  %v1310 = vpop.f32.mrf.mxu0
  %v1311 = vadd.f32 %v1241, %v1310
  %v1312 = vpop.f32.mrf.mxu0
  %1313 = vdwg.mxu0
  %1314 = vmatprep.subr.mxu0 0.0
  %1315 = vmatpush1.msra.mxu0 %v930
  %1316 = vmatprep.subr.mxu0 0.0
  %1317 = vmatpush1.msra.mxu0 %v929
  %1318 = vmatprep.subr.mxu0 0.0
  %1319 = vmatpush1.msra.mxu0 %v928
  %1320 = vmatprep.subr.mxu0 0.0
  %1321 = vmatpush1.msra.mxu0 %v927
  %1322 = vmatprep.subr.mxu0 0.0
  %1323 = vmatpush1.msra.mxu0 %v926
  %1324 = vmatprep.subr.mxu0 0.0
  %1325 = vmatpush1.msra.mxu0 %v925
  %1326 = vmatprep.subr.mxu0 0.0
  %1327 = vmatpush1.msra.mxu0 %v924
  %1328 = vmatprep.subr.mxu0 0.0
  %1329 = vmatpush1.msra.mxu0 %v923
  %1330 = vmatprep.subr.mxu0 0.0
  %1331 = vmatpush1.msra.mxu0 %v922
  %1332 = vmatprep.subr.mxu0 0.0
  %1333 = vmatpush1.msra.mxu0 %v921
  %1334 = vmatprep.subr.mxu0 0.0
  %1335 = vmatpush1.msra.mxu0 %v920
  %1336 = vmatprep.subr.mxu0 0.0
  %1337 = vmatpush1.msra.mxu0 %v919
  %1338 = vmatprep.subr.mxu0 0.0
  %1339 = vmatpush1.msra.mxu0 %v918
  %1340 = vmatprep.subr.mxu0 0.0
  %1341 = vmatpush1.msra.mxu0 %v917
  %1342 = vmatprep.subr.mxu0 0.0
  %1343 = vmatpush1.msra.mxu0 %v916
  %1344 = vmatprep.subr.mxu0 0.0
  %1345 = vmatpush1.msra.mxu0 %v915
  %1346 = vmatprep.subr.mxu0 0.0
  %1347 = vmatpush2.msra.mxu0 %v946
  %1348 = vmatprep.subr.mxu0 0.0
  %1349 = vmatpush2.msra.mxu0 %v945
  %1350 = vmatprep.subr.mxu0 0.0
  %1351 = vmatpush2.msra.mxu0 %v944
  %1352 = vmatprep.subr.mxu0 0.0
  %1353 = vmatpush2.msra.mxu0 %v943
  %1354 = vmatprep.subr.mxu0 0.0
  %1355 = vmatpush2.msra.mxu0 %v942
  %1356 = vmatprep.subr.mxu0 0.0
  %1357 = vmatpush2.msra.mxu0 %v941
  %1358 = vmatprep.subr.mxu0 0.0
  %1359 = vmatpush2.msra.mxu0 %v940
  %1360 = vmatprep.subr.mxu0 0.0
  %1361 = vmatpush2.msra.mxu0 %v939
  %1362 = vmatprep.subr.mxu0 0.0
  %1363 = vmatpush2.msra.mxu0 %v938
  %1364 = vmatprep.subr.mxu0 0.0
  %1365 = vmatpush2.msra.mxu0 %v937
  %1366 = vmatprep.subr.mxu0 0.0
  %1367 = vmatpush2.msra.mxu0 %v936
  %1368 = vmatprep.subr.mxu0 0.0
  %1369 = vmatpush2.msra.mxu0 %v935
  %1370 = vmatprep.subr.mxu0 0.0
  %1371 = vmatpush2.msra.mxu0 %v934
  %1372 = vmatprep.subr.mxu0 0.0
  %1373 = vmatpush2.msra.mxu0 %v933
  %1374 = vmatprep.subr.mxu0 0.0
  %1375 = vmatpush2.msra.mxu0 %v932
  %1376 = vmatprep.subr.mxu0 0.0
  %1377 = vmatpush2.msra.mxu0 %v931
  %1378 = vmatprep.mubr.f32.mxu0 %v781
  %1379 = vmatmul.mubr.f32.gmra.mxu0 %v780
  %v1380 = vpop.f32.mrf.mxu0
  %v1381 = vadd.f32 %v1311, %v1380
  %v1382 = vpop.f32.mrf.mxu0
  %1383 = vdwg.mxu0
  %1384 = vmatprep.subr.mxu0 0.0
  %1385 = vmatpush1.msra.mxu0 %v962
  %1386 = vmatprep.subr.mxu0 0.0
  %1387 = vmatpush1.msra.mxu0 %v961
  %1388 = vmatprep.subr.mxu0 0.0
  %1389 = vmatpush1.msra.mxu0 %v960
  %1390 = vmatprep.subr.mxu0 0.0
  %1391 = vmatpush1.msra.mxu0 %v959
  %1392 = vmatprep.subr.mxu0 0.0
  %1393 = vmatpush1.msra.mxu0 %v958
  %1394 = vmatprep.subr.mxu0 0.0
  %1395 = vmatpush1.msra.mxu0 %v957
  %1396 = vmatprep.subr.mxu0 0.0
  %1397 = vmatpush1.msra.mxu0 %v956
  %1398 = vmatprep.subr.mxu0 0.0
  %1399 = vmatpush1.msra.mxu0 %v955
  %1400 = vmatprep.subr.mxu0 0.0
  %1401 = vmatpush1.msra.mxu0 %v954
  %1402 = vmatprep.subr.mxu0 0.0
  %1403 = vmatpush1.msra.mxu0 %v953
  %1404 = vmatprep.subr.mxu0 0.0
  %1405 = vmatpush1.msra.mxu0 %v952
  %1406 = vmatprep.subr.mxu0 0.0
  %1407 = vmatpush1.msra.mxu0 %v951
  %1408 = vmatprep.subr.mxu0 0.0
  %1409 = vmatpush1.msra.mxu0 %v950
  %1410 = vmatprep.subr.mxu0 0.0
  %1411 = vmatpush1.msra.mxu0 %v949
  %1412 = vmatprep.subr.mxu0 0.0
  %1413 = vmatpush1.msra.mxu0 %v948
  %1414 = vmatprep.subr.mxu0 0.0
  %1415 = vmatpush1.msra.mxu0 %v947
  %1416 = vmatprep.subr.mxu0 0.0
  %1417 = vmatpush2.msra.mxu0 %v978
  %1418 = vmatprep.subr.mxu0 0.0
  %1419 = vmatpush2.msra.mxu0 %v977
  %1420 = vmatprep.subr.mxu0 0.0
  %1421 = vmatpush2.msra.mxu0 %v976
  %1422 = vmatprep.subr.mxu0 0.0
  %1423 = vmatpush2.msra.mxu0 %v975
  %1424 = vmatprep.subr.mxu0 0.0
  %1425 = vmatpush2.msra.mxu0 %v974
  %1426 = vmatprep.subr.mxu0 0.0
  %1427 = vmatpush2.msra.mxu0 %v973
  %1428 = vmatprep.subr.mxu0 0.0
  %1429 = vmatpush2.msra.mxu0 %v972
  %1430 = vmatprep.subr.mxu0 0.0
  %1431 = vmatpush2.msra.mxu0 %v971
  %1432 = vmatprep.subr.mxu0 0.0
  %1433 = vmatpush2.msra.mxu0 %v970
  %1434 = vmatprep.subr.mxu0 0.0
  %1435 = vmatpush2.msra.mxu0 %v969
  %1436 = vmatprep.subr.mxu0 0.0
  %1437 = vmatpush2.msra.mxu0 %v968
  %1438 = vmatprep.subr.mxu0 0.0
  %1439 = vmatpush2.msra.mxu0 %v967
  %1440 = vmatprep.subr.mxu0 0.0
  %1441 = vmatpush2.msra.mxu0 %v966
  %1442 = vmatprep.subr.mxu0 0.0
  %1443 = vmatpush2.msra.mxu0 %v965
  %1444 = vmatprep.subr.mxu0 0.0
  %1445 = vmatpush2.msra.mxu0 %v964
  %1446 = vmatprep.subr.mxu0 0.0
  %1447 = vmatpush2.msra.mxu0 %v963
  %1448 = vmatprep.mubr.f32.mxu0 %v783
  %1449 = vmatmul.mubr.f32.gmra.mxu0 %v782
  %v1450 = vpop.f32.mrf.mxu0
  %v1451 = vadd.f32 %v1381, %v1450
  %v1452 = vpop.f32.mrf.mxu0
  %1453 = vdwg.mxu0
  %1454 = vmatprep.subr.mxu0 0.0
  %1455 = vmatpush1.msra.mxu0 %v994
  %1456 = vmatprep.subr.mxu0 0.0
  %1457 = vmatpush1.msra.mxu0 %v993
  %1458 = vmatprep.subr.mxu0 0.0
  %1459 = vmatpush1.msra.mxu0 %v992
  %1460 = vmatprep.subr.mxu0 0.0
  %1461 = vmatpush1.msra.mxu0 %v991
  %1462 = vmatprep.subr.mxu0 0.0
  %1463 = vmatpush1.msra.mxu0 %v990
  %1464 = vmatprep.subr.mxu0 0.0
  %1465 = vmatpush1.msra.mxu0 %v989
  %1466 = vmatprep.subr.mxu0 0.0
  %1467 = vmatpush1.msra.mxu0 %v988
  %1468 = vmatprep.subr.mxu0 0.0
  %1469 = vmatpush1.msra.mxu0 %v987
  %1470 = vmatprep.subr.mxu0 0.0
  %1471 = vmatpush1.msra.mxu0 %v986
  %1472 = vmatprep.subr.mxu0 0.0
  %1473 = vmatpush1.msra.mxu0 %v985
  %1474 = vmatprep.subr.mxu0 0.0
  %1475 = vmatpush1.msra.mxu0 %v984
  %1476 = vmatprep.subr.mxu0 0.0
  %1477 = vmatpush1.msra.mxu0 %v983
  %1478 = vmatprep.subr.mxu0 0.0
  %1479 = vmatpush1.msra.mxu0 %v982
  %1480 = vmatprep.subr.mxu0 0.0
  %1481 = vmatpush1.msra.mxu0 %v981
  %1482 = vmatprep.subr.mxu0 0.0
  %1483 = vmatpush1.msra.mxu0 %v980
  %1484 = vmatprep.subr.mxu0 0.0
  %1485 = vmatpush1.msra.mxu0 %v979
  %1486 = vmatprep.subr.mxu0 0.0
  %1487 = vmatpush2.msra.mxu0 %v1010
  %1488 = vmatprep.subr.mxu0 0.0
  %1489 = vmatpush2.msra.mxu0 %v1009
  %1490 = vmatprep.subr.mxu0 0.0
  %1491 = vmatpush2.msra.mxu0 %v1008
  %1492 = vmatprep.subr.mxu0 0.0
  %1493 = vmatpush2.msra.mxu0 %v1007
  %1494 = vmatprep.subr.mxu0 0.0
  %1495 = vmatpush2.msra.mxu0 %v1006
  %1496 = vmatprep.subr.mxu0 0.0
  %1497 = vmatpush2.msra.mxu0 %v1005
  %1498 = vmatprep.subr.mxu0 0.0
  %1499 = vmatpush2.msra.mxu0 %v1004
  %1500 = vmatprep.subr.mxu0 0.0
  %1501 = vmatpush2.msra.mxu0 %v1003
  %1502 = vmatprep.subr.mxu0 0.0
  %1503 = vmatpush2.msra.mxu0 %v1002
  %1504 = vmatprep.subr.mxu0 0.0
  %1505 = vmatpush2.msra.mxu0 %v1001
  %1506 = vmatprep.subr.mxu0 0.0
  %1507 = vmatpush2.msra.mxu0 %v1000
  %1508 = vmatprep.subr.mxu0 0.0
  %1509 = vmatpush2.msra.mxu0 %v999
  %1510 = vmatprep.subr.mxu0 0.0
  %1511 = vmatpush2.msra.mxu0 %v998
  %1512 = vmatprep.subr.mxu0 0.0
  %1513 = vmatpush2.msra.mxu0 %v997
  %1514 = vmatprep.subr.mxu0 0.0
  %1515 = vmatpush2.msra.mxu0 %v996
  %1516 = vmatprep.subr.mxu0 0.0
  %1517 = vmatpush2.msra.mxu0 %v995
  %1518 = vmatprep.mubr.f32.mxu0 %v785
  %1519 = vmatmul.mubr.f32.gmra.mxu0 %v784
  %v1520 = vpop.f32.mrf.mxu0
  %v1521 = vadd.f32 %v1451, %v1520
  %v1522 = vpop.f32.mrf.mxu0
  %1523 = vdwg.mxu0
  %1524 = vmatprep.subr.mxu0 0.0
  %1525 = vmatpush1.msra.mxu0 %v1026
  %1526 = vmatprep.subr.mxu0 0.0
  %1527 = vmatpush1.msra.mxu0 %v1025
  %1528 = vmatprep.subr.mxu0 0.0
  %1529 = vmatpush1.msra.mxu0 %v1024
  %1530 = vmatprep.subr.mxu0 0.0
  %1531 = vmatpush1.msra.mxu0 %v1023
  %1532 = vmatprep.subr.mxu0 0.0
  %1533 = vmatpush1.msra.mxu0 %v1022
  %1534 = vmatprep.subr.mxu0 0.0
  %1535 = vmatpush1.msra.mxu0 %v1021
  %1536 = vmatprep.subr.mxu0 0.0
  %1537 = vmatpush1.msra.mxu0 %v1020
  %1538 = vmatprep.subr.mxu0 0.0
  %1539 = vmatpush1.msra.mxu0 %v1019
  %1540 = vmatprep.subr.mxu0 0.0
  %1541 = vmatpush1.msra.mxu0 %v1018
  %1542 = vmatprep.subr.mxu0 0.0
  %1543 = vmatpush1.msra.mxu0 %v1017
  %1544 = vmatprep.subr.mxu0 0.0
  %1545 = vmatpush1.msra.mxu0 %v1016
  %1546 = vmatprep.subr.mxu0 0.0
  %1547 = vmatpush1.msra.mxu0 %v1015
  %1548 = vmatprep.subr.mxu0 0.0
  %1549 = vmatpush1.msra.mxu0 %v1014
  %1550 = vmatprep.subr.mxu0 0.0
  %1551 = vmatpush1.msra.mxu0 %v1013
  %1552 = vmatprep.subr.mxu0 0.0
  %1553 = vmatpush1.msra.mxu0 %v1012
  %1554 = vmatprep.subr.mxu0 0.0
  %1555 = vmatpush1.msra.mxu0 %v1011
  %1556 = vmatprep.subr.mxu0 0.0
  %1557 = vmatpush2.msra.mxu0 0.0
  %1558 = vmatprep.subr.mxu0 0.0
  %1559 = vmatpush2.msra.mxu0 0.0
  %1560 = vmatprep.subr.mxu0 0.0
  %1561 = vmatpush2.msra.mxu0 0.0
  %1562 = vmatprep.subr.mxu0 0.0
  %1563 = vmatpush2.msra.mxu0 0.0
  %1564 = vmatprep.subr.mxu0 0.0
  %1565 = vmatpush2.msra.mxu0 0.0
  %1566 = vmatprep.subr.mxu0 0.0
  %1567 = vmatpush2.msra.mxu0 0.0
  %1568 = vmatprep.subr.mxu0 0.0
  %1569 = vmatpush2.msra.mxu0 0.0
  %1570 = vmatprep.subr.mxu0 0.0
  %1571 = vmatpush2.msra.mxu0 0.0
  %1572 = vmatprep.subr.mxu0 0.0
  %1573 = vmatpush2.msra.mxu0 0.0
  %1574 = vmatprep.subr.mxu0 0.0
  %1575 = vmatpush2.msra.mxu0 0.0
  %1576 = vmatprep.subr.mxu0 0.0
  %1577 = vmatpush2.msra.mxu0 0.0
  %1578 = vmatprep.subr.mxu0 0.0
  %1579 = vmatpush2.msra.mxu0 0.0
  %1580 = vmatprep.subr.mxu0 0.0
  %1581 = vmatpush2.msra.mxu0 0.0
  %1582 = vmatprep.subr.mxu0 0.0
  %1583 = vmatpush2.msra.mxu0 0.0
  %1584 = vmatprep.subr.mxu0 0.0
  %1585 = vmatpush2.msra.mxu0 0.0
  %1586 = vmatprep.subr.mxu0 0.0
  %1587 = vmatpush2.msra.mxu0 0.0
  %1588 = vmatprep.mubr.f32.mxu0 0.0
  %1589 = vmatmul.mubr.f32.gmra.mxu0 %v786
  %v1590 = vpop.f32.mrf.mxu0
  %v1591 = vadd.f32 %v1521, %v1590
  %v1592 = vpop.f32.mrf.mxu0
  %1593 = vdwg.mxu0
  %1594 = vst [vmem:[%s3] sm:$0xff] %v1591
  // Predicated region
  $region14: #{pose_classifier_v3_forward.1} parent=0 // pred_check
    _
  $region15: #{pose_classifier_v3_forward.1} parent=0 // pred_check_branch
    %1596 = sbr.rel (0) target = $region17
  $region16: #{pose_classifier_v3_forward.1} parent=0 // pred_region
    _
  $region17: #{pose_classifier_v3_forward.1} parent=0 // pred_fallthru
    _
  // Predicated region
  $region18: #{pose_classifier_v3_forward.1} parent=0 // pred_check
    _
  $region19: #{pose_classifier_v3_forward.1} parent=0 // pred_check_branch
    %1598 = sbr.rel (0) target = $region21
  $region20: #{pose_classifier_v3_forward.1} parent=0 // pred_region
    _
  $region21: #{pose_classifier_v3_forward.1} parent=0 // pred_fallthru
    _

</llo_original>
